<compile_context>
chip_gen: v7x
topology: tpu7x:2x2x1
jax: 0.10.0
libtpu: 0.0.40
codegen_flags: <defaults>
</compile_context>

<pallas_src>
import functools

import jax
import jax.numpy as jnp
from jax.experimental import pallas as pl
from jax.experimental.pallas import tpu as pltpu

N_LAYERS = 7   # 6 tanh-activated linears + 1 final linear
LANE = 128     # TPU lane width; all feature dims zero-padded to this
TILE_B = 128   # batch rows per grid step (multiple of 8, fills MXU rows)


def _mlp_kernel(x_ref, w_ref, b_ref, out_ref):
    """One batch tile through the full 7-layer MLP.

    x_ref  : (TILE_B, LANE)          f32  zero-padded input activations
    w_ref  : (N_LAYERS, LANE, LANE)  f32  zero-padded weights, (fan_in, fan_out)
    b_ref  : (N_LAYERS, 1, LANE)     f32  zero-padded biases
    out_ref: (TILE_B, LANE)          f32  zero-padded output activations
    """
    h = x_ref[...]
    for layer in range(N_LAYERS):           # static unroll, 7 MXU matmuls
        h = jnp.dot(h, w_ref[layer], preferred_element_type=jnp.float32)
        h = h + b_ref[layer]                 # (1, LANE) broadcast
        if layer < N_LAYERS - 1:
            h = jnp.tanh(h)                  # EUP; padded lanes stay exactly 0
    out_ref[...] = h


@functools.partial(jax.jit, static_argnames=("n_out",))
def lift_net_forward(x, w_packed, b_packed, *, n_out):
    """x: (B, n_in) f32; packed params zero-padded to LANE. Returns (B, n_out) f32."""
    batch, n_in = x.shape
    b_pad = pl.cdiv(batch, TILE_B) * TILE_B

    # Zero-pad batch to a TILE_B multiple and features to the lane width.
    x_p = jnp.zeros((b_pad, LANE), jnp.float32).at[:batch, :n_in].set(x)

    out_p = pl.pallas_call(
        _mlp_kernel,
        out_shape=jax.ShapeDtypeStruct((b_pad, LANE), jnp.float32),
        grid=(b_pad // TILE_B,),
        in_specs=[
            # Activation stream: one (TILE_B, LANE) tile per grid step.
            pl.BlockSpec((TILE_B, LANE), lambda i: (i, 0)),
            # Weights / biases: constant index_map -> DMA'd once, VMEM-resident.
            pl.BlockSpec((N_LAYERS, LANE, LANE), lambda i: (0, 0, 0)),
            pl.BlockSpec((N_LAYERS, 1, LANE), lambda i: (0, 0, 0)),
        ],
        out_specs=pl.BlockSpec((TILE_B, LANE), lambda i: (i, 0)),
        compiler_params=pltpu.CompilerParams(
            dimension_semantics=("parallel",),   # shard batch across TCs on v7x
        ),
    )(x_p, w_packed, b_packed)

    return out_p[:batch, :n_out]


def init_params(key, n_input, n_hidden, n_output):
    """Match the torch init: weight ~ Normal(0, 0.1), bias = 0.

    Weights are stored transposed vs. torch.nn.Linear, i.e. (fan_in, fan_out),
    so the kernel computes x @ W + b directly.
    """
    dims = [n_input] + [n_hidden] * 6 + [n_output]
    params = []
    for layer in range(N_LAYERS):
        key, sub = jax.random.split(key)
        fan_in, fan_out = dims[layer], dims[layer + 1]
        w = 0.1 * jax.random.normal(sub, (fan_in, fan_out), dtype=jnp.float32)
        b = jnp.zeros((fan_out,), dtype=jnp.float32)
        params.append((w, b))
    return params


def pack_params(params):
    """Pack per-layer (W, b) into two zero-padded lane-dense arrays."""
    w_packed = jnp.zeros((N_LAYERS, LANE, LANE), jnp.float32)
    b_packed = jnp.zeros((N_LAYERS, 1, LANE), jnp.float32)
    for layer, (w, b) in enumerate(params):
        fi, fo = w.shape
        w_packed = w_packed.at[layer, :fi, :fo].set(w)
        b_packed = b_packed.at[layer, 0, :fo].set(b.reshape(-1))
    return w_packed, b_packed


def reference_forward(x, params):
    h = x
    for i, (w, b) in enumerate(params):
        h = h @ w + b[None, :]
        if i < N_LAYERS - 1:
            h = jnp.tanh(h)
    return h


if __name__ == "__main__":
    # Three-body state has 12 dims (n_input = 12); hidden = 32, lifted dim = 64.
    # Batch 256 -> 2 grid steps, exercising the pipelined / parallel batch axis.
    batch, n_input, n_hidden, n_output = 256, 12, 32, 64

    key = jax.random.PRNGKey(0)
    key, xkey = jax.random.split(key)
    x = jax.random.normal(xkey, (batch, n_input), dtype=jnp.float32)

    params = init_params(key, n_input, n_hidden, n_output)
    w_packed, b_packed = pack_params(params)

    out = lift_net_forward(x, w_packed, b_packed, n_out=n_output)
    out = jax.block_until_ready(out)

    ref = reference_forward(x, params)
    assert out.shape == (batch, n_output), out.shape
    assert jnp.allclose(out, ref, atol=1e-5, rtol=1e-5), "mismatch vs JAX reference"

    print("KERNEL_OK")
</pallas_src>

<mosaic_0001>
module attributes {stable_mosaic.version = 11 : i64} {
  func.func @_mlp_kernel(%arg0: i32, %arg1: memref<128x128xf32, #tpu.memory_space<vmem>>, %arg2: memref<7x128x128xf32, #tpu.memory_space<vmem>>, %arg3: memref<7x1x128xf32, #tpu.memory_space<vmem>>, %arg4: memref<128x128xf32, #tpu.memory_space<vmem>>) attributes {dimension_semantics = [#tpu.dimension_semantics<parallel>], iteration_bounds = array<i64: 2>, scalar_prefetch = 0 : i64, scratch_operands = 0 : i64, tpu.core_type = #tpu.core_type<tc>, window_params = [{transform_indices = @transform_0, window_bounds = array<i64: 128, 128>}, {pipeline_mode = #tpu.pipeline_mode<synchronous>, transform_indices = @transform_1, window_bounds = array<i64: 7, 128, 128>}, {pipeline_mode = #tpu.pipeline_mode<synchronous>, transform_indices = @transform_2, window_bounds = array<i64: 7, 1, 128>}, {transform_indices = @transform_3, window_bounds = array<i64: 128, 128>}]} {
    %c0 = arith.constant 0 : index
    %c0_0 = arith.constant 0 : index
    %0 = vector.load %arg1[%c0, %c0_0] : memref<128x128xf32, #tpu.memory_space<vmem>>, vector<128x128xf32>
    %c0_1 = arith.constant 0 : index
    %c0_2 = arith.constant 0 : index
    %c0_3 = arith.constant 0 : index
    %1 = vector.load %arg2[%c0_1, %c0_2, %c0_3] : memref<7x128x128xf32, #tpu.memory_space<vmem>>, vector<1x128x128xf32>
    %2 = vector.shape_cast %1 : vector<1x128x128xf32> to vector<128x128xf32>
    %cst = arith.constant dense<0.000000e+00> : vector<128x128xf32>
    %3 = tpu.matmul %0, %2, %cst {dimension_numbers = #tpu.dot_dimension_numbers<[1], [0], [0], [1], [0, 0, 1, 1], [], []>} : vector<128x128xf32>, vector<128x128xf32>, vector<128x128xf32> -> vector<128x128xf32>
    %c0_4 = arith.constant 0 : index
    %c0_5 = arith.constant 0 : index
    %c0_6 = arith.constant 0 : index
    %4 = vector.load %arg3[%c0_4, %c0_5, %c0_6] : memref<7x1x128xf32, #tpu.memory_space<vmem>>, vector<1x1x128xf32>
    %5 = vector.shape_cast %4 : vector<1x1x128xf32> to vector<1x128xf32>
    %6 = vector.broadcast %5 : vector<1x128xf32> to vector<128x128xf32>
    %7 = arith.addf %3, %6 : vector<128x128xf32>
    %8 = math.tanh %7 : vector<128x128xf32>
    %c1 = arith.constant 1 : index
    %c0_7 = arith.constant 0 : index
    %c0_8 = arith.constant 0 : index
    %9 = vector.load %arg2[%c1, %c0_7, %c0_8] : memref<7x128x128xf32, #tpu.memory_space<vmem>>, vector<1x128x128xf32>
    %10 = vector.shape_cast %9 : vector<1x128x128xf32> to vector<128x128xf32>
    %cst_9 = arith.constant dense<0.000000e+00> : vector<128x128xf32>
    %11 = tpu.matmul %8, %10, %cst_9 {dimension_numbers = #tpu.dot_dimension_numbers<[1], [0], [0], [1], [0, 0, 1, 1], [], []>} : vector<128x128xf32>, vector<128x128xf32>, vector<128x128xf32> -> vector<128x128xf32>
    %c1_10 = arith.constant 1 : index
    %c0_11 = arith.constant 0 : index
    %c0_12 = arith.constant 0 : index
    %12 = vector.load %arg3[%c1_10, %c0_11, %c0_12] : memref<7x1x128xf32, #tpu.memory_space<vmem>>, vector<1x1x128xf32>
    %13 = vector.shape_cast %12 : vector<1x1x128xf32> to vector<1x128xf32>
    %14 = vector.broadcast %13 : vector<1x128xf32> to vector<128x128xf32>
    %15 = arith.addf %11, %14 : vector<128x128xf32>
    %16 = math.tanh %15 : vector<128x128xf32>
    %c2 = arith.constant 2 : index
    %c0_13 = arith.constant 0 : index
    %c0_14 = arith.constant 0 : index
    %17 = vector.load %arg2[%c2, %c0_13, %c0_14] : memref<7x128x128xf32, #tpu.memory_space<vmem>>, vector<1x128x128xf32>
    %18 = vector.shape_cast %17 : vector<1x128x128xf32> to vector<128x128xf32>
    %cst_15 = arith.constant dense<0.000000e+00> : vector<128x128xf32>
    %19 = tpu.matmul %16, %18, %cst_15 {dimension_numbers = #tpu.dot_dimension_numbers<[1], [0], [0], [1], [0, 0, 1, 1], [], []>} : vector<128x128xf32>, vector<128x128xf32>, vector<128x128xf32> -> vector<128x128xf32>
    %c2_16 = arith.constant 2 : index
    %c0_17 = arith.constant 0 : index
    %c0_18 = arith.constant 0 : index
    %20 = vector.load %arg3[%c2_16, %c0_17, %c0_18] : memref<7x1x128xf32, #tpu.memory_space<vmem>>, vector<1x1x128xf32>
    %21 = vector.shape_cast %20 : vector<1x1x128xf32> to vector<1x128xf32>
    %22 = vector.broadcast %21 : vector<1x128xf32> to vector<128x128xf32>
    %23 = arith.addf %19, %22 : vector<128x128xf32>
    %24 = math.tanh %23 : vector<128x128xf32>
    %c3 = arith.constant 3 : index
    %c0_19 = arith.constant 0 : index
    %c0_20 = arith.constant 0 : index
    %25 = vector.load %arg2[%c3, %c0_19, %c0_20] : memref<7x128x128xf32, #tpu.memory_space<vmem>>, vector<1x128x128xf32>
    %26 = vector.shape_cast %25 : vector<1x128x128xf32> to vector<128x128xf32>
    %cst_21 = arith.constant dense<0.000000e+00> : vector<128x128xf32>
    %27 = tpu.matmul %24, %26, %cst_21 {dimension_numbers = #tpu.dot_dimension_numbers<[1], [0], [0], [1], [0, 0, 1, 1], [], []>} : vector<128x128xf32>, vector<128x128xf32>, vector<128x128xf32> -> vector<128x128xf32>
    %c3_22 = arith.constant 3 : index
    %c0_23 = arith.constant 0 : index
    %c0_24 = arith.constant 0 : index
    %28 = vector.load %arg3[%c3_22, %c0_23, %c0_24] : memref<7x1x128xf32, #tpu.memory_space<vmem>>, vector<1x1x128xf32>
    %29 = vector.shape_cast %28 : vector<1x1x128xf32> to vector<1x128xf32>
    %30 = vector.broadcast %29 : vector<1x128xf32> to vector<128x128xf32>
    %31 = arith.addf %27, %30 : vector<128x128xf32>
    %32 = math.tanh %31 : vector<128x128xf32>
    %c4 = arith.constant 4 : index
    %c0_25 = arith.constant 0 : index
    %c0_26 = arith.constant 0 : index
    %33 = vector.load %arg2[%c4, %c0_25, %c0_26] : memref<7x128x128xf32, #tpu.memory_space<vmem>>, vector<1x128x128xf32>
    %34 = vector.shape_cast %33 : vector<1x128x128xf32> to vector<128x128xf32>
    %cst_27 = arith.constant dense<0.000000e+00> : vector<128x128xf32>
    %35 = tpu.matmul %32, %34, %cst_27 {dimension_numbers = #tpu.dot_dimension_numbers<[1], [0], [0], [1], [0, 0, 1, 1], [], []>} : vector<128x128xf32>, vector<128x128xf32>, vector<128x128xf32> -> vector<128x128xf32>
    %c4_28 = arith.constant 4 : index
    %c0_29 = arith.constant 0 : index
    %c0_30 = arith.constant 0 : index
    %36 = vector.load %arg3[%c4_28, %c0_29, %c0_30] : memref<7x1x128xf32, #tpu.memory_space<vmem>>, vector<1x1x128xf32>
    %37 = vector.shape_cast %36 : vector<1x1x128xf32> to vector<1x128xf32>
    %38 = vector.broadcast %37 : vector<1x128xf32> to vector<128x128xf32>
    %39 = arith.addf %35, %38 : vector<128x128xf32>
    %40 = math.tanh %39 : vector<128x128xf32>
    %c5 = arith.constant 5 : index
    %c0_31 = arith.constant 0 : index
    %c0_32 = arith.constant 0 : index
    %41 = vector.load %arg2[%c5, %c0_31, %c0_32] : memref<7x128x128xf32, #tpu.memory_space<vmem>>, vector<1x128x128xf32>
    %42 = vector.shape_cast %41 : vector<1x128x128xf32> to vector<128x128xf32>
    %cst_33 = arith.constant dense<0.000000e+00> : vector<128x128xf32>
    %43 = tpu.matmul %40, %42, %cst_33 {dimension_numbers = #tpu.dot_dimension_numbers<[1], [0], [0], [1], [0, 0, 1, 1], [], []>} : vector<128x128xf32>, vector<128x128xf32>, vector<128x128xf32> -> vector<128x128xf32>
    %c5_34 = arith.constant 5 : index
    %c0_35 = arith.constant 0 : index
    %c0_36 = arith.constant 0 : index
    %44 = vector.load %arg3[%c5_34, %c0_35, %c0_36] : memref<7x1x128xf32, #tpu.memory_space<vmem>>, vector<1x1x128xf32>
    %45 = vector.shape_cast %44 : vector<1x1x128xf32> to vector<1x128xf32>
    %46 = vector.broadcast %45 : vector<1x128xf32> to vector<128x128xf32>
    %47 = arith.addf %43, %46 : vector<128x128xf32>
    %48 = math.tanh %47 : vector<128x128xf32>
    %c6 = arith.constant 6 : index
    %c0_37 = arith.constant 0 : index
    %c0_38 = arith.constant 0 : index
    %49 = vector.load %arg2[%c6, %c0_37, %c0_38] : memref<7x128x128xf32, #tpu.memory_space<vmem>>, vector<1x128x128xf32>
    %50 = vector.shape_cast %49 : vector<1x128x128xf32> to vector<128x128xf32>
    %cst_39 = arith.constant dense<0.000000e+00> : vector<128x128xf32>
    %51 = tpu.matmul %48, %50, %cst_39 {dimension_numbers = #tpu.dot_dimension_numbers<[1], [0], [0], [1], [0, 0, 1, 1], [], []>} : vector<128x128xf32>, vector<128x128xf32>, vector<128x128xf32> -> vector<128x128xf32>
    %c6_40 = arith.constant 6 : index
    %c0_41 = arith.constant 0 : index
    %c0_42 = arith.constant 0 : index
    %52 = vector.load %arg3[%c6_40, %c0_41, %c0_42] : memref<7x1x128xf32, #tpu.memory_space<vmem>>, vector<1x1x128xf32>
    %53 = vector.shape_cast %52 : vector<1x1x128xf32> to vector<1x128xf32>
    %54 = vector.broadcast %53 : vector<1x128xf32> to vector<128x128xf32>
    %55 = arith.addf %51, %54 : vector<128x128xf32>
    %c0_43 = arith.constant 0 : index
    %c0_44 = arith.constant 0 : index
    %56 = vector.load %arg4[%c0_43, %c0_44] : memref<128x128xf32, #tpu.memory_space<vmem>>, vector<128x128xf32>
    tpu.vector_store %arg4[%c0_43, %c0_44], %55 {strides = array<i32>} : memref<128x128xf32, #tpu.memory_space<vmem>>, vector<128x128xf32>,
    return
  }
  func.func @transform_0(%arg0: i32) -> (i32, i32) {
    %c0_i32 = arith.constant 0 : i32
    %c0_i32_0 = arith.constant 0 : i32
    return %arg0, %c0_i32 : i32, i32
  }
  func.func @transform_1(%arg0: i32) -> (i32, i32, i32) {
    %c0_i32 = arith.constant 0 : i32
    %c0_i32_0 = arith.constant 0 : i32
    %c0_i32_1 = arith.constant 0 : i32
    %c0_i32_2 = arith.constant 0 : i32
    return %c0_i32, %c0_i32_0, %c0_i32_1 : i32, i32, i32
  }
  func.func @transform_2(%arg0: i32) -> (i32, i32, i32) {
    %c0_i32 = arith.constant 0 : i32
    %c0_i32_0 = arith.constant 0 : i32
    %c0_i32_1 = arith.constant 0 : i32
    %c0_i32_2 = arith.constant 0 : i32
    return %c0_i32, %c0_i32_0, %c0_i32_1 : i32, i32, i32
  }
  func.func @transform_3(%arg0: i32) -> (i32, i32) {
    %c0_i32 = arith.constant 0 : i32
    %c0_i32_0 = arith.constant 0 : i32
    return %arg0, %c0_i32 : i32, i32
  }
}

</mosaic_0001>

<llo_original>
// kernel: lift_net_forward.1
$region0: #{lift_net_forward.1}
  #allocation0 [shape = 'u32[]', space=smem, size = 0x4, offset = 0x4, fixed_abs, tag = 'smem constant byte address 0x4 - core index']
  #allocation1 [shape = 'u32[144,128]{1,0:T(1,128)}', space=vmem, size = 0x12000, scoped, tag = 'internal scratch']
  %s0 = inlined_call_operand.vmem [shape: f32[256,128], index: 0, kind: input, shape index: {}]
  %s1 = inlined_call_operand.vmem [shape: f32[7,128,128], index: 1, kind: input, shape index: {}]
  %s2 = inlined_call_operand.vmem [shape: f32[7,1,128], index: 2, kind: input, shape index: {}]
  %s3 = inlined_call_operand.vmem [shape: f32[256,128], index: 3, kind: output, shape index: {}]
  %s4 = sld [smem:[#allocation0]]
  $region45: #{lift_net_forward.1} parent=0
    _
  %s6 = ssub.s32 1, %s4
  %s7 = scalar_select 0, %s6, %s4
  loop: start=0, step=1, limit=4
  $region2: #{lift_net_forward.1} parent=0 // loop_pre_header
    _
  $region3: #{lift_net_forward.1} parent=0 // loop_header
    %s9 = sphi 0, %s13
    %p10 = scmp.ge.s32.totalorder %s9, 4
    %s19 = sphi 0, %s21
    %s22 = sphi 0, %s19
    %s23 = sphi 0, %s22
    %s39 = sphi 0, %s23
    %s43 = sphi 0, %s43
    %s45 = sphi 0, %s43
    %s46 = sphi 0, %s45
    %s60 = sphi 0, %s46
    %s64 = sphi 0, %s64
    %s66 = sphi 0, %s64
    %s67 = sphi 0, %s66
    %s81 = sphi 0, %s67
    %s87 = sphi 0, %s89
    %s90 = sphi 0, %s87
    %s91 = sphi 0, %s90
    %s107 = sphi 0, %s91
  $region4: #{lift_net_forward.1} parent=0 // loop_header_branch
    %12 = sbr.rel (%p10) target = $region8
  $region5: #{lift_net_forward.1} parent=0 // loop_body
    %s14 = ssub.s32 %s9, 1
    %s15 = ssub.s32 %s9, 2
    %s16 = sadd.s32 %s9, 1
    %s17 = ssub.s32 %s9, %s16
    %p18 = scmp.eq.s32.totalorder %s17, 0
    %s20 = sadd.s32 %s19, 1
    %s21 = scalar_select %p18, %s19, %s20
    %p24 = pneg %p18
    %p25 = scmp.eq.s32.totalorder %s9, 1
    %p26 = por %p24, %p25
    %p27 = scmp.ne.s32.totalorder %s19, %s22
    %p28 = scmp.eq.s32.totalorder %s9, 0
    %p29 = por %p27, %p28
    %p30 = scmp.ne.s32.totalorder %s19, %s22
    %p31 = scmp.eq.s32.totalorder %s14, 1
    %p32 = por %p30, %p31
    %p33 = scmp.ne.s32.totalorder %s22, %s23
    %p34 = scmp.eq.s32.totalorder %s14, 0
    %p35 = por %p33, %p34
    %p36 = scmp.ne.s32.totalorder %s22, %s23
    %p37 = scmp.eq.s32.totalorder %s15, 1
    %p38 = por %p36, %p37
    %p40 = scmp.ne.s32.totalorder %s23, %s39
    %p41 = scmp.eq.s32.totalorder %s15, 0
    %p42 = por %p40, %p41
    %s44 = sadd.s32 %s43, 1
    %p47 = scmp.eq.s32.totalorder %s9, 1
    %p48 = scmp.ne.s32.totalorder %s43, %s45
    %p49 = scmp.eq.s32.totalorder %s9, 0
    %p50 = por %p48, %p49
    %p51 = scmp.ne.s32.totalorder %s43, %s45
    %p52 = scmp.eq.s32.totalorder %s14, 1
    %p53 = por %p51, %p52
    %p54 = scmp.ne.s32.totalorder %s45, %s46
    %p55 = scmp.eq.s32.totalorder %s14, 0
    %p56 = por %p54, %p55
    %p57 = scmp.ne.s32.totalorder %s45, %s46
    %p58 = scmp.eq.s32.totalorder %s15, 1
    %p59 = por %p57, %p58
    %p61 = scmp.ne.s32.totalorder %s46, %s60
    %p62 = scmp.eq.s32.totalorder %s15, 0
    %p63 = por %p61, %p62
    %s65 = sadd.s32 %s64, 1
    %p68 = scmp.eq.s32.totalorder %s9, 1
    %p69 = scmp.ne.s32.totalorder %s64, %s66
    %p70 = scmp.eq.s32.totalorder %s9, 0
    %p71 = por %p69, %p70
    %p72 = scmp.ne.s32.totalorder %s64, %s66
    %p73 = scmp.eq.s32.totalorder %s14, 1
    %p74 = por %p72, %p73
    %p75 = scmp.ne.s32.totalorder %s66, %s67
    %p76 = scmp.eq.s32.totalorder %s14, 0
    %p77 = por %p75, %p76
    %p78 = scmp.ne.s32.totalorder %s66, %s67
    %p79 = scmp.eq.s32.totalorder %s15, 1
    %p80 = por %p78, %p79
    %p82 = scmp.ne.s32.totalorder %s67, %s81
    %p83 = scmp.eq.s32.totalorder %s15, 0
    %p84 = por %p82, %p83
    %s85 = ssub.s32 %s9, %s16
    %p86 = scmp.eq.s32.totalorder %s85, 0
    %s88 = sadd.s32 %s87, 1
    %s89 = scalar_select %p86, %s87, %s88
    %p92 = pneg %p86
    %p93 = scmp.eq.s32.totalorder %s9, 1
    %p94 = por %p92, %p93
    %p95 = scmp.ne.s32.totalorder %s87, %s90
    %p96 = scmp.eq.s32.totalorder %s9, 0
    %p97 = por %p95, %p96
    %p98 = scmp.ne.s32.totalorder %s87, %s90
    %p99 = scmp.eq.s32.totalorder %s14, 1
    %p100 = por %p98, %p99
    %p101 = scmp.ne.s32.totalorder %s90, %s91
    %p102 = scmp.eq.s32.totalorder %s14, 0
    %p103 = por %p101, %p102
    %p104 = scmp.ne.s32.totalorder %s90, %s91
    %p105 = scmp.eq.s32.totalorder %s15, 1
    %p106 = por %p104, %p105
    %p108 = scmp.ne.s32.totalorder %s91, %s107
    %p109 = scmp.eq.s32.totalorder %s15, 0
    %p110 = por %p108, %p109
    %p111 = scmp.le.s32.totalorder 1, %s9
    %p112 = scmp.lt.s32.totalorder %s9, 3
    %p113 = pnand %p111, %p112
    %p114 = pneg %p113
    // Predicated region
    $region9: #{lift_net_forward.1} parent=5 // pred_check
      _
    $region10: #{lift_net_forward.1} parent=5 // pred_check_branch
      %116 = sbr.rel (%p113) target = $region12
    $region11: #{lift_net_forward.1} parent=5 // pred_region
      %s117 = ssub.s32 %s9, 1
      // Predicated region
      $region13: #{lift_net_forward.1} parent=11 // pred_check
        %p118 = pneg %p56
      $region14: #{lift_net_forward.1} parent=11 // pred_check_branch
        %120 = sbr.rel (%p118) target = $region16
      $region15: #{lift_net_forward.1} parent=11 // pred_region
        _
      $region16: #{lift_net_forward.1} parent=11 // pred_fallthru
        _
      // Predicated region
      $region17: #{lift_net_forward.1} parent=11 // pred_check
        %p121 = pneg %p77
      $region18: #{lift_net_forward.1} parent=11 // pred_check_branch
        %123 = sbr.rel (%p121) target = $region20
      $region19: #{lift_net_forward.1} parent=11 // pred_region
        _
      $region20: #{lift_net_forward.1} parent=11 // pred_fallthru
        _
    $region12: #{lift_net_forward.1} parent=5 // pred_fallthru
      _
    %p124 = scmp.lt.s32.totalorder %s9, 2
    // Predicated region
    $region21: #{lift_net_forward.1} parent=5 // pred_check
      %p125 = pneg %p124
    $region22: #{lift_net_forward.1} parent=5 // pred_check_branch
      %127 = sbr.rel (%p125) target = $region24
    $region23: #{lift_net_forward.1} parent=5 // pred_region
      // Predicated region
      $region25: #{lift_net_forward.1} parent=23 // pred_check
        %p128 = pneg %p29
      $region26: #{lift_net_forward.1} parent=23 // pred_check_branch
        %130 = sbr.rel (%p128) target = $region28
      $region27: #{lift_net_forward.1} parent=23 // pred_region
        %s131 = smul.u32 16, %s9
        %p132 = scmp.lt.s32.totalorder %s131, 31
        %s133 = scalar_select %p132, %s131, 31
        %s134 = smul.addr %s133, 8
        %s135 = scalar_lea.vmem %s0, %s134
        %s136 = smul.u32 16, %s9
      $region28: #{lift_net_forward.1} parent=23 // pred_fallthru
        _
    $region24: #{lift_net_forward.1} parent=5 // pred_fallthru
      _
    %p137 = scmp.le.s32.totalorder 1, %s9
    %p138 = scmp.lt.s32.totalorder %s9, 3
    %p139 = pnand %p137, %p138
    %p140 = pneg %p139
    // Predicated region
    $region29: #{lift_net_forward.1} parent=5 // pred_check
      _
    $region30: #{lift_net_forward.1} parent=5 // pred_check_branch
      %142 = sbr.rel (%p139) target = $region32
    $region31: #{lift_net_forward.1} parent=5 // pred_region
      %s143 = ssub.s32 %s9, 1
      %s144 = smul.u32 16, %s14
      %p145 = scmp.lt.s32.totalorder %s144, 31
      %s146 = scalar_select %p145, %s144, 31
      %s147 = smul.addr %s146, 8
      %s148 = scalar_lea.vmem %s0, %s147
      %p149 = pneg %p35
      %p150 = pneg %p32
      %p151 = pneg %p56
      %p152 = pneg %p53
      %p153 = pneg %p77
      %p154 = pneg %p74
      %p155 = pneg %p103
      %p156 = pneg %p100
      %s157 = smul.u32 16, %s14
      %p158 = scmp.lt.s32.totalorder %s157, 31
      %s159 = scalar_select %p158, %s157, 31
      %s160 = smul.addr %s159, 8
      %s161 = scalar_lea.vmem %s3, %s160
      %s162 = smul.u32 16, %s14
      %p163 = scmp.lt.s32.totalorder %s162, 31
      %s164 = scalar_select %p163, %s162, 31
      %s165 = smul.addr %s164, 8
      %s166 = scalar_lea.vmem %s0, %s165
      %s167 = smul.u32 16, %s14
      %s168 = smul.u32 16, %s14
      %p169 = scmp.lt.s32.totalorder %s168, 31
      %s170 = scalar_select %p169, %s168, 31
      %s171 = smul.addr %s170, 8
      %s172 = scalar_lea.vmem %s3, %s171
      %s173 = smul.u32 16, %s14
      %v174 = vld [vmem:[%s166] sm:$0xff]
      %v175 = vld [vmem:[%s166 + $0x8] sm:$0xff]
      %v176 = vld [vmem:[%s166 + $0x10] sm:$0xff]
      %v177 = vld [vmem:[%s166 + $0x18] sm:$0xff]
      %v178 = vld [vmem:[%s166 + $0x20] sm:$0xff]
      %v179 = vld [vmem:[%s166 + $0x28] sm:$0xff]
      %v180 = vld [vmem:[%s166 + $0x30] sm:$0xff]
      %v181 = vld [vmem:[%s166 + $0x38] sm:$0xff]
      %v182 = vld [vmem:[%s166 + $0x40] sm:$0xff]
      %v183 = vld [vmem:[%s166 + $0x48] sm:$0xff]
      %v184 = vld [vmem:[%s166 + $0x50] sm:$0xff]
      %v185 = vld [vmem:[%s166 + $0x58] sm:$0xff]
      %v186 = vld [vmem:[%s166 + $0x60] sm:$0xff]
      %v187 = vld [vmem:[%s166 + $0x68] sm:$0xff]
      %v188 = vld [vmem:[%s166 + $0x70] sm:$0xff]
      %v189 = vld [vmem:[%s166 + $0x78] sm:$0xff]
      %v190 = vld [vmem:[%s1] sm:$0xff]
      %v191 = vld [vmem:[%s1 + $0x8] sm:$0xff]
      %v192 = vld [vmem:[%s1 + $0x10] sm:$0xff]
      %v193 = vld [vmem:[%s1 + $0x18] sm:$0xff]
      %v194 = vld [vmem:[%s1 + $0x20] sm:$0xff]
      %v195 = vld [vmem:[%s1 + $0x28] sm:$0xff]
      %v196 = vld [vmem:[%s1 + $0x30] sm:$0xff]
      %v197 = vld [vmem:[%s1 + $0x38] sm:$0xff]
      %v198 = vld [vmem:[%s1 + $0x40] sm:$0xff]
      %v199 = vld [vmem:[%s1 + $0x48] sm:$0xff]
      %v200 = vld [vmem:[%s1 + $0x50] sm:$0xff]
      %v201 = vld [vmem:[%s1 + $0x58] sm:$0xff]
      %v202 = vld [vmem:[%s1 + $0x60] sm:$0xff]
      %v203 = vld [vmem:[%s1 + $0x68] sm:$0xff]
      %v204 = vld [vmem:[%s1 + $0x70] sm:$0xff]
      %v205 = vld [vmem:[%s1 + $0x78] sm:$0xff]
      %v206 = vld [vmem:[%s2] sm:$0x1]
      %v208 = vlaneseq
      %v209 = vshrl.u32 %v208, 7
      %v210 = vsub.s32 0, %v209
      %v211 = vrot.slane %v206, %v210
      %213 = vmatprep.subr.mxu0 0.0
      %214 = vmatpush1.msra.mxu0 %v190
      %215 = vmatprep.subr.mxu0 0.0
      %216 = vmatpush1.msra.mxu0 %v191
      %217 = vmatprep.subr.mxu0 0.0
      %218 = vmatpush1.msra.mxu0 %v192
      %219 = vmatprep.subr.mxu0 0.0
      %220 = vmatpush1.msra.mxu0 %v193
      %221 = vmatprep.subr.mxu0 0.0
      %222 = vmatpush1.msra.mxu0 %v194
      %223 = vmatprep.subr.mxu0 0.0
      %224 = vmatpush1.msra.mxu0 %v195
      %225 = vmatprep.subr.mxu0 0.0
      %226 = vmatpush1.msra.mxu0 %v196
      %227 = vmatprep.subr.mxu0 0.0
      %228 = vmatpush1.msra.mxu0 %v197
      %229 = vmatprep.subr.mxu0 0.0
      %230 = vmatpush1.msra.mxu0 %v198
      %231 = vmatprep.subr.mxu0 0.0
      %232 = vmatpush1.msra.mxu0 %v199
      %233 = vmatprep.subr.mxu0 0.0
      %234 = vmatpush1.msra.mxu0 %v200
      %235 = vmatprep.subr.mxu0 0.0
      %236 = vmatpush1.msra.mxu0 %v201
      %237 = vmatprep.subr.mxu0 0.0
      %238 = vmatpush1.msra.mxu0 %v202
      %239 = vmatprep.subr.mxu0 0.0
      %240 = vmatpush1.msra.mxu0 %v203
      %241 = vmatprep.subr.mxu0 0.0
      %242 = vmatpush1.msra.mxu0 %v204
      %243 = vmatprep.subr.mxu0 0.0
      %244 = vmatpush1.msra.mxu0 %v205
      %245 = vmatprep.subr.mxu0 0.0
      %246 = vmatpush1.msra.mxu0 0.0
      %247 = vmatprep.subr.mxu0 0.0
      %248 = vmatpush1.msra.mxu0 0.0
      %249 = vmatprep.subr.mxu0 0.0
      %250 = vmatpush1.msra.mxu0 0.0
      %251 = vmatprep.subr.mxu0 0.0
      %252 = vmatpush1.msra.mxu0 0.0
      %253 = vmatprep.subr.mxu0 0.0
      %254 = vmatpush1.msra.mxu0 0.0
      %255 = vmatprep.subr.mxu0 0.0
      %256 = vmatpush1.msra.mxu0 0.0
      %257 = vmatprep.subr.mxu0 0.0
      %258 = vmatpush1.msra.mxu0 0.0
      %259 = vmatprep.subr.mxu0 0.0
      %260 = vmatpush1.msra.mxu0 0.0
      %261 = vmatprep.subr.mxu0 0.0
      %262 = vmatpush1.msra.mxu0 0.0
      %263 = vmatprep.subr.mxu0 0.0
      %264 = vmatpush1.msra.mxu0 0.0
      %265 = vmatprep.subr.mxu0 0.0
      %266 = vmatpush1.msra.mxu0 0.0
      %267 = vmatprep.subr.mxu0 0.0
      %268 = vmatpush1.msra.mxu0 0.0
      %269 = vmatprep.subr.mxu0 0.0
      %270 = vmatpush1.msra.mxu0 0.0
      %271 = vmatprep.subr.mxu0 0.0
      %272 = vmatpush1.msra.mxu0 0.0
      %273 = vmatprep.subr.mxu0 0.0
      %274 = vmatpush1.msra.mxu0 0.0
      %275 = vmatprep.subr.mxu0 0.0
      %276 = vmatpush1.msra.mxu0 0.0
      %277 = vmatprep.mubr.f32.mxu0 0.0
      %278 = vmatmul.mubr.f32.gmra.mrb[0].mxu0 %v174
      %v279 = vpop.f32.mrb[0].mxu0
      %v280 = vadd.f32 %v211, %v279
      %v281 = vpop.f32.mrb[0].mxu0
      %282 = vmatprep.mubr.f32.mxu0 0.0
      %283 = vmatmul.mubr.f32.gmra.mrb[0].mxu0 %v175
      %v284 = vpop.f32.mrb[0].mxu0
      %v285 = vadd.f32 %v211, %v284
      %v286 = vpop.f32.mrb[0].mxu0
      %287 = vmatprep.mubr.f32.mxu0 0.0
      %288 = vmatmul.mubr.f32.gmra.mrb[0].mxu0 %v176
      %v289 = vpop.f32.mrb[0].mxu0
      %v290 = vadd.f32 %v211, %v289
      %v291 = vpop.f32.mrb[0].mxu0
      %292 = vmatprep.mubr.f32.mxu0 0.0
      %293 = vmatmul.mubr.f32.gmra.mrb[0].mxu0 %v177
      %v294 = vpop.f32.mrb[0].mxu0
      %v295 = vadd.f32 %v211, %v294
      %v296 = vpop.f32.mrb[0].mxu0
      %297 = vmatprep.mubr.f32.mxu0 0.0
      %298 = vmatmul.mubr.f32.gmra.mrb[0].mxu0 %v178
      %v299 = vpop.f32.mrb[0].mxu0
      %v300 = vadd.f32 %v211, %v299
      %v301 = vpop.f32.mrb[0].mxu0
      %302 = vmatprep.mubr.f32.mxu0 0.0
      %303 = vmatmul.mubr.f32.gmra.mrb[0].mxu0 %v179
      %v304 = vpop.f32.mrb[0].mxu0
      %v305 = vadd.f32 %v211, %v304
      %v306 = vpop.f32.mrb[0].mxu0
      %307 = vmatprep.mubr.f32.mxu0 0.0
      %308 = vmatmul.mubr.f32.gmra.mrb[0].mxu0 %v180
      %v309 = vpop.f32.mrb[0].mxu0
      %v310 = vadd.f32 %v211, %v309
      %v311 = vpop.f32.mrb[0].mxu0
      %312 = vmatprep.mubr.f32.mxu0 0.0
      %313 = vmatmul.mubr.f32.gmra.mrb[0].mxu0 %v181
      %v314 = vpop.f32.mrb[0].mxu0
      %v315 = vadd.f32 %v211, %v314
      %v316 = vpop.f32.mrb[0].mxu0
      %317 = vmatprep.mubr.f32.mxu0 0.0
      %318 = vmatmul.mubr.f32.gmra.mrb[0].mxu0 %v182
      %v319 = vpop.f32.mrb[0].mxu0
      %v320 = vadd.f32 %v211, %v319
      %v321 = vpop.f32.mrb[0].mxu0
      %322 = vmatprep.mubr.f32.mxu0 0.0
      %323 = vmatmul.mubr.f32.gmra.mrb[0].mxu0 %v183
      %v324 = vpop.f32.mrb[0].mxu0
      %v325 = vadd.f32 %v211, %v324
      %v326 = vpop.f32.mrb[0].mxu0
      %327 = vmatprep.mubr.f32.mxu0 0.0
      %328 = vmatmul.mubr.f32.gmra.mrb[0].mxu0 %v184
      %v329 = vpop.f32.mrb[0].mxu0
      %v330 = vadd.f32 %v211, %v329
      %v331 = vpop.f32.mrb[0].mxu0
      %332 = vmatprep.mubr.f32.mxu0 0.0
      %333 = vmatmul.mubr.f32.gmra.mrb[0].mxu0 %v185
      %v334 = vpop.f32.mrb[0].mxu0
      %v335 = vadd.f32 %v211, %v334
      %v336 = vpop.f32.mrb[0].mxu0
      %337 = vmatprep.mubr.f32.mxu0 0.0
      %338 = vmatmul.mubr.f32.gmra.mrb[0].mxu0 %v186
      %v339 = vpop.f32.mrb[0].mxu0
      %v340 = vadd.f32 %v211, %v339
      %v341 = vpop.f32.mrb[0].mxu0
      %342 = vmatprep.mubr.f32.mxu0 0.0
      %343 = vmatmul.mubr.f32.gmra.mrb[0].mxu0 %v187
      %v344 = vpop.f32.mrb[0].mxu0
      %v345 = vadd.f32 %v211, %v344
      %v346 = vpop.f32.mrb[0].mxu0
      %347 = vmatprep.mubr.f32.mxu0 0.0
      %348 = vmatmul.mubr.f32.gmra.mrb[0].mxu0 %v188
      %v349 = vpop.f32.mrb[0].mxu0
      %v350 = vadd.f32 %v211, %v349
      %v351 = vpop.f32.mrb[0].mxu0
      %352 = vmatprep.mubr.f32.mxu0 0.0
      %353 = vmatmul.mubr.f32.gmra.mrb[0].mxu0 %v189
      %v354 = vpop.f32.mrb[0].mxu0
      %v355 = vadd.f32 %v211, %v354
      %v356 = vpop.f32.mrb[0].mxu0
      %357 = vdwg.mxu0
      %v358 = vtanh.pop %v280
      %v359 = vtanh.pop %v285
      %v360 = vtanh.pop %v290
      %v361 = vtanh.pop %v295
      %v362 = vtanh.pop %v300
      %v363 = vtanh.pop %v305
      %v364 = vtanh.pop %v310
      %v365 = vtanh.pop %v315
      %v366 = vtanh.pop %v320
      %v367 = vtanh.pop %v325
      %v368 = vtanh.pop %v330
      %v369 = vtanh.pop %v335
      %v370 = vtanh.pop %v340
      %v371 = vtanh.pop %v345
      %v372 = vtanh.pop %v350
      %v373 = vtanh.pop %v355
      %s374 = scalar_lea.vmem %s1, 128
      %v375 = vld [vmem:[%s374] sm:$0xff]
      %v376 = vld [vmem:[%s374 + $0x8] sm:$0xff]
      %v377 = vld [vmem:[%s374 + $0x10] sm:$0xff]
      %v378 = vld [vmem:[%s374 + $0x18] sm:$0xff]
      %v379 = vld [vmem:[%s374 + $0x20] sm:$0xff]
      %v380 = vld [vmem:[%s374 + $0x28] sm:$0xff]
      %v381 = vld [vmem:[%s374 + $0x30] sm:$0xff]
      %v382 = vld [vmem:[%s374 + $0x38] sm:$0xff]
      %v383 = vld [vmem:[%s374 + $0x40] sm:$0xff]
      %v384 = vld [vmem:[%s374 + $0x48] sm:$0xff]
      %v385 = vld [vmem:[%s374 + $0x50] sm:$0xff]
      %v386 = vld [vmem:[%s374 + $0x58] sm:$0xff]
      %v387 = vld [vmem:[%s374 + $0x60] sm:$0xff]
      %v388 = vld [vmem:[%s374 + $0x68] sm:$0xff]
      %v389 = vld [vmem:[%s374 + $0x70] sm:$0xff]
      %v390 = vld [vmem:[%s374 + $0x78] sm:$0xff]
      %s391 = scalar_lea.vmem %s2, 1
      %v392 = vld [vmem:[%s391] sm:$0x1]
      %v394 = vlaneseq
      %v395 = vshrl.u32 %v394, 7
      %v396 = vsub.s32 0, %v395
      %v397 = vrot.slane %v392, %v396
      %399 = vmatprep.subr.mxu0 0.0
      %400 = vmatpush1.msra.mxu0 %v375
      %401 = vmatprep.subr.mxu0 0.0
      %402 = vmatpush1.msra.mxu0 %v376
      %403 = vmatprep.subr.mxu0 0.0
      %404 = vmatpush1.msra.mxu0 %v377
      %405 = vmatprep.subr.mxu0 0.0
      %406 = vmatpush1.msra.mxu0 %v378
      %407 = vmatprep.subr.mxu0 0.0
      %408 = vmatpush1.msra.mxu0 %v379
      %409 = vmatprep.subr.mxu0 0.0
      %410 = vmatpush1.msra.mxu0 %v380
      %411 = vmatprep.subr.mxu0 0.0
      %412 = vmatpush1.msra.mxu0 %v381
      %413 = vmatprep.subr.mxu0 0.0
      %414 = vmatpush1.msra.mxu0 %v382
      %415 = vmatprep.subr.mxu0 0.0
      %416 = vmatpush1.msra.mxu0 %v383
      %417 = vmatprep.subr.mxu0 0.0
      %418 = vmatpush1.msra.mxu0 %v384
      %419 = vmatprep.subr.mxu0 0.0
      %420 = vmatpush1.msra.mxu0 %v385
      %421 = vmatprep.subr.mxu0 0.0
      %422 = vmatpush1.msra.mxu0 %v386
      %423 = vmatprep.subr.mxu0 0.0
      %424 = vmatpush1.msra.mxu0 %v387
      %425 = vmatprep.subr.mxu0 0.0
      %426 = vmatpush1.msra.mxu0 %v388
      %427 = vmatprep.subr.mxu0 0.0
      %428 = vmatpush1.msra.mxu0 %v389
      %429 = vmatprep.subr.mxu0 0.0
      %430 = vmatpush1.msra.mxu0 %v390
      %431 = vmatprep.subr.mxu0 0.0
      %432 = vmatpush1.msra.mxu0 0.0
      %433 = vmatprep.subr.mxu0 0.0
      %434 = vmatpush1.msra.mxu0 0.0
      %435 = vmatprep.subr.mxu0 0.0
      %436 = vmatpush1.msra.mxu0 0.0
      %437 = vmatprep.subr.mxu0 0.0
      %438 = vmatpush1.msra.mxu0 0.0
      %439 = vmatprep.subr.mxu0 0.0
      %440 = vmatpush1.msra.mxu0 0.0
      %441 = vmatprep.subr.mxu0 0.0
      %442 = vmatpush1.msra.mxu0 0.0
      %443 = vmatprep.subr.mxu0 0.0
      %444 = vmatpush1.msra.mxu0 0.0
      %445 = vmatprep.subr.mxu0 0.0
      %446 = vmatpush1.msra.mxu0 0.0
      %447 = vmatprep.subr.mxu0 0.0
      %448 = vmatpush1.msra.mxu0 0.0
      %449 = vmatprep.subr.mxu0 0.0
      %450 = vmatpush1.msra.mxu0 0.0
      %451 = vmatprep.subr.mxu0 0.0
      %452 = vmatpush1.msra.mxu0 0.0
      %453 = vmatprep.subr.mxu0 0.0
      %454 = vmatpush1.msra.mxu0 0.0
      %455 = vmatprep.subr.mxu0 0.0
      %456 = vmatpush1.msra.mxu0 0.0
      %457 = vmatprep.subr.mxu0 0.0
      %458 = vmatpush1.msra.mxu0 0.0
      %459 = vmatprep.subr.mxu0 0.0
      %460 = vmatpush1.msra.mxu0 0.0
      %461 = vmatprep.subr.mxu0 0.0
      %462 = vmatpush1.msra.mxu0 0.0
      %463 = vmatprep.mubr.f32.mxu0 0.0
      %464 = vmatmul.mubr.f32.gmra.mrb[0].mxu0 %v358
      %v465 = vpop.f32.mrb[0].mxu0
      %v466 = vadd.f32 %v397, %v465
      %v467 = vpop.f32.mrb[0].mxu0
      %468 = vmatprep.mubr.f32.mxu0 0.0
      %469 = vmatmul.mubr.f32.gmra.mrb[0].mxu0 %v359
      %v470 = vpop.f32.mrb[0].mxu0
      %v471 = vadd.f32 %v397, %v470
      %v472 = vpop.f32.mrb[0].mxu0
      %473 = vmatprep.mubr.f32.mxu0 0.0
      %474 = vmatmul.mubr.f32.gmra.mrb[0].mxu0 %v360
      %v475 = vpop.f32.mrb[0].mxu0
      %v476 = vadd.f32 %v397, %v475
      %v477 = vpop.f32.mrb[0].mxu0
      %478 = vmatprep.mubr.f32.mxu0 0.0
      %479 = vmatmul.mubr.f32.gmra.mrb[0].mxu0 %v361
      %v480 = vpop.f32.mrb[0].mxu0
      %v481 = vadd.f32 %v397, %v480
      %v482 = vpop.f32.mrb[0].mxu0
      %483 = vmatprep.mubr.f32.mxu0 0.0
      %484 = vmatmul.mubr.f32.gmra.mrb[0].mxu0 %v362
      %v485 = vpop.f32.mrb[0].mxu0
      %v486 = vadd.f32 %v397, %v485
      %v487 = vpop.f32.mrb[0].mxu0
      %488 = vmatprep.mubr.f32.mxu0 0.0
      %489 = vmatmul.mubr.f32.gmra.mrb[0].mxu0 %v363
      %v490 = vpop.f32.mrb[0].mxu0
      %v491 = vadd.f32 %v397, %v490
      %v492 = vpop.f32.mrb[0].mxu0
      %493 = vmatprep.mubr.f32.mxu0 0.0
      %494 = vmatmul.mubr.f32.gmra.mrb[0].mxu0 %v364
      %v495 = vpop.f32.mrb[0].mxu0
      %v496 = vadd.f32 %v397, %v495
      %v497 = vpop.f32.mrb[0].mxu0
      %498 = vmatprep.mubr.f32.mxu0 0.0
      %499 = vmatmul.mubr.f32.gmra.mrb[0].mxu0 %v365
      %v500 = vpop.f32.mrb[0].mxu0
      %v501 = vadd.f32 %v397, %v500
      %v502 = vpop.f32.mrb[0].mxu0
      %503 = vmatprep.mubr.f32.mxu0 0.0
      %504 = vmatmul.mubr.f32.gmra.mrb[0].mxu0 %v366
      %v505 = vpop.f32.mrb[0].mxu0
      %v506 = vadd.f32 %v397, %v505
      %v507 = vpop.f32.mrb[0].mxu0
      %508 = vmatprep.mubr.f32.mxu0 0.0
      %509 = vmatmul.mubr.f32.gmra.mrb[0].mxu0 %v367
      %v510 = vpop.f32.mrb[0].mxu0
      %v511 = vadd.f32 %v397, %v510
      %v512 = vpop.f32.mrb[0].mxu0
      %513 = vmatprep.mubr.f32.mxu0 0.0
      %514 = vmatmul.mubr.f32.gmra.mrb[0].mxu0 %v368
      %v515 = vpop.f32.mrb[0].mxu0
      %v516 = vadd.f32 %v397, %v515
      %v517 = vpop.f32.mrb[0].mxu0
      %518 = vmatprep.mubr.f32.mxu0 0.0
      %519 = vmatmul.mubr.f32.gmra.mrb[0].mxu0 %v369
      %v520 = vpop.f32.mrb[0].mxu0
      %v521 = vadd.f32 %v397, %v520
      %v522 = vpop.f32.mrb[0].mxu0
      %523 = vmatprep.mubr.f32.mxu0 0.0
      %524 = vmatmul.mubr.f32.gmra.mrb[0].mxu0 %v370
      %v525 = vpop.f32.mrb[0].mxu0
      %v526 = vadd.f32 %v397, %v525
      %v527 = vpop.f32.mrb[0].mxu0
      %528 = vmatprep.mubr.f32.mxu0 0.0
      %529 = vmatmul.mubr.f32.gmra.mrb[0].mxu0 %v371
      %v530 = vpop.f32.mrb[0].mxu0
      %v531 = vadd.f32 %v397, %v530
      %v532 = vpop.f32.mrb[0].mxu0
      %533 = vmatprep.mubr.f32.mxu0 0.0
      %534 = vmatmul.mubr.f32.gmra.mrb[0].mxu0 %v372
      %v535 = vpop.f32.mrb[0].mxu0
      %v536 = vadd.f32 %v397, %v535
      %v537 = vpop.f32.mrb[0].mxu0
      %538 = vmatprep.mubr.f32.mxu0 0.0
      %539 = vmatmul.mubr.f32.gmra.mrb[0].mxu0 %v373
      %v540 = vpop.f32.mrb[0].mxu0
      %v541 = vadd.f32 %v397, %v540
      %v542 = vpop.f32.mrb[0].mxu0
      %543 = vdwg.mxu0
      %v544 = vtanh.pop %v466
      %v545 = vtanh.pop %v471
      %v546 = vtanh.pop %v476
      %v547 = vtanh.pop %v481
      %v548 = vtanh.pop %v486
      %v549 = vtanh.pop %v491
      %v550 = vtanh.pop %v496
      %v551 = vtanh.pop %v501
      %v552 = vtanh.pop %v506
      %v553 = vtanh.pop %v511
      %v554 = vtanh.pop %v516
      %v555 = vtanh.pop %v521
      %v556 = vtanh.pop %v526
      %v557 = vtanh.pop %v531
      %v558 = vtanh.pop %v536
      %v559 = vtanh.pop %v541
      %s560 = scalar_lea.vmem %s1, 256
      %v561 = vld [vmem:[%s560] sm:$0xff]
      %v562 = vld [vmem:[%s560 + $0x8] sm:$0xff]
      %v563 = vld [vmem:[%s560 + $0x10] sm:$0xff]
      %v564 = vld [vmem:[%s560 + $0x18] sm:$0xff]
      %v565 = vld [vmem:[%s560 + $0x20] sm:$0xff]
      %v566 = vld [vmem:[%s560 + $0x28] sm:$0xff]
      %v567 = vld [vmem:[%s560 + $0x30] sm:$0xff]
      %v568 = vld [vmem:[%s560 + $0x38] sm:$0xff]
      %v569 = vld [vmem:[%s560 + $0x40] sm:$0xff]
      %v570 = vld [vmem:[%s560 + $0x48] sm:$0xff]
      %v571 = vld [vmem:[%s560 + $0x50] sm:$0xff]
      %v572 = vld [vmem:[%s560 + $0x58] sm:$0xff]
      %v573 = vld [vmem:[%s560 + $0x60] sm:$0xff]
      %v574 = vld [vmem:[%s560 + $0x68] sm:$0xff]
      %v575 = vld [vmem:[%s560 + $0x70] sm:$0xff]
      %v576 = vld [vmem:[%s560 + $0x78] sm:$0xff]
      %s577 = scalar_lea.vmem %s2, 2
      %v578 = vld [vmem:[%s577] sm:$0x1]
      %v580 = vlaneseq
      %v581 = vshrl.u32 %v580, 7
      %v582 = vsub.s32 0, %v581
      %v583 = vrot.slane %v578, %v582
      %585 = vmatprep.subr.mxu0 0.0
      %586 = vmatpush1.msra.mxu0 %v561
      %587 = vmatprep.subr.mxu0 0.0
      %588 = vmatpush1.msra.mxu0 %v562
      %589 = vmatprep.subr.mxu0 0.0
      %590 = vmatpush1.msra.mxu0 %v563
      %591 = vmatprep.subr.mxu0 0.0
      %592 = vmatpush1.msra.mxu0 %v564
      %593 = vmatprep.subr.mxu0 0.0
      %594 = vmatpush1.msra.mxu0 %v565
      %595 = vmatprep.subr.mxu0 0.0
      %596 = vmatpush1.msra.mxu0 %v566
      %597 = vmatprep.subr.mxu0 0.0
      %598 = vmatpush1.msra.mxu0 %v567
      %599 = vmatprep.subr.mxu0 0.0
      %600 = vmatpush1.msra.mxu0 %v568
      %601 = vmatprep.subr.mxu0 0.0
      %602 = vmatpush1.msra.mxu0 %v569
      %603 = vmatprep.subr.mxu0 0.0
      %604 = vmatpush1.msra.mxu0 %v570
      %605 = vmatprep.subr.mxu0 0.0
      %606 = vmatpush1.msra.mxu0 %v571
      %607 = vmatprep.subr.mxu0 0.0
      %608 = vmatpush1.msra.mxu0 %v572
      %609 = vmatprep.subr.mxu0 0.0
      %610 = vmatpush1.msra.mxu0 %v573
      %611 = vmatprep.subr.mxu0 0.0
      %612 = vmatpush1.msra.mxu0 %v574
      %613 = vmatprep.subr.mxu0 0.0
      %614 = vmatpush1.msra.mxu0 %v575
      %615 = vmatprep.subr.mxu0 0.0
      %616 = vmatpush1.msra.mxu0 %v576
      %617 = vmatprep.subr.mxu0 0.0
      %618 = vmatpush1.msra.mxu0 0.0
      %619 = vmatprep.subr.mxu0 0.0
      %620 = vmatpush1.msra.mxu0 0.0
      %621 = vmatprep.subr.mxu0 0.0
      %622 = vmatpush1.msra.mxu0 0.0
      %623 = vmatprep.subr.mxu0 0.0
      %624 = vmatpush1.msra.mxu0 0.0
      %625 = vmatprep.subr.mxu0 0.0
      %626 = vmatpush1.msra.mxu0 0.0
      %627 = vmatprep.subr.mxu0 0.0
      %628 = vmatpush1.msra.mxu0 0.0
      %629 = vmatprep.subr.mxu0 0.0
      %630 = vmatpush1.msra.mxu0 0.0
      %631 = vmatprep.subr.mxu0 0.0
      %632 = vmatpush1.msra.mxu0 0.0
      %633 = vmatprep.subr.mxu0 0.0
      %634 = vmatpush1.msra.mxu0 0.0
      %635 = vmatprep.subr.mxu0 0.0
      %636 = vmatpush1.msra.mxu0 0.0
      %637 = vmatprep.subr.mxu0 0.0
      %638 = vmatpush1.msra.mxu0 0.0
      %639 = vmatprep.subr.mxu0 0.0
      %640 = vmatpush1.msra.mxu0 0.0
      %641 = vmatprep.subr.mxu0 0.0
      %642 = vmatpush1.msra.mxu0 0.0
      %643 = vmatprep.subr.mxu0 0.0
      %644 = vmatpush1.msra.mxu0 0.0
      %645 = vmatprep.subr.mxu0 0.0
      %646 = vmatpush1.msra.mxu0 0.0
      %647 = vmatprep.subr.mxu0 0.0
      %648 = vmatpush1.msra.mxu0 0.0
      %649 = vmatprep.mubr.f32.mxu0 0.0
      %650 = vmatmul.mubr.f32.gmra.mrb[0].mxu0 %v544
      %v651 = vpop.f32.mrb[0].mxu0
      %v652 = vadd.f32 %v583, %v651
      %v653 = vpop.f32.mrb[0].mxu0
      %654 = vmatprep.mubr.f32.mxu0 0.0
      %655 = vmatmul.mubr.f32.gmra.mrb[0].mxu0 %v545
      %v656 = vpop.f32.mrb[0].mxu0
      %v657 = vadd.f32 %v583, %v656
      %v658 = vpop.f32.mrb[0].mxu0
      %659 = vmatprep.mubr.f32.mxu0 0.0
      %660 = vmatmul.mubr.f32.gmra.mrb[0].mxu0 %v546
      %v661 = vpop.f32.mrb[0].mxu0
      %v662 = vadd.f32 %v583, %v661
      %v663 = vpop.f32.mrb[0].mxu0
      %664 = vmatprep.mubr.f32.mxu0 0.0
      %665 = vmatmul.mubr.f32.gmra.mrb[0].mxu0 %v547
      %v666 = vpop.f32.mrb[0].mxu0
      %v667 = vadd.f32 %v583, %v666
      %v668 = vpop.f32.mrb[0].mxu0
      %669 = vmatprep.mubr.f32.mxu0 0.0
      %670 = vmatmul.mubr.f32.gmra.mrb[0].mxu0 %v548
      %v671 = vpop.f32.mrb[0].mxu0
      %v672 = vadd.f32 %v583, %v671
      %v673 = vpop.f32.mrb[0].mxu0
      %674 = vmatprep.mubr.f32.mxu0 0.0
      %675 = vmatmul.mubr.f32.gmra.mrb[0].mxu0 %v549
      %v676 = vpop.f32.mrb[0].mxu0
      %v677 = vadd.f32 %v583, %v676
      %v678 = vpop.f32.mrb[0].mxu0
      %679 = vmatprep.mubr.f32.mxu0 0.0
      %680 = vmatmul.mubr.f32.gmra.mrb[0].mxu0 %v550
      %v681 = vpop.f32.mrb[0].mxu0
      %v682 = vadd.f32 %v583, %v681
      %v683 = vpop.f32.mrb[0].mxu0
      %684 = vmatprep.mubr.f32.mxu0 0.0
      %685 = vmatmul.mubr.f32.gmra.mrb[0].mxu0 %v551
      %v686 = vpop.f32.mrb[0].mxu0
      %v687 = vadd.f32 %v583, %v686
      %v688 = vpop.f32.mrb[0].mxu0
      %689 = vmatprep.mubr.f32.mxu0 0.0
      %690 = vmatmul.mubr.f32.gmra.mrb[0].mxu0 %v552
      %v691 = vpop.f32.mrb[0].mxu0
      %v692 = vadd.f32 %v583, %v691
      %v693 = vpop.f32.mrb[0].mxu0
      %694 = vmatprep.mubr.f32.mxu0 0.0
      %695 = vmatmul.mubr.f32.gmra.mrb[0].mxu0 %v553
      %v696 = vpop.f32.mrb[0].mxu0
      %v697 = vadd.f32 %v583, %v696
      %v698 = vpop.f32.mrb[0].mxu0
      %699 = vmatprep.mubr.f32.mxu0 0.0
      %700 = vmatmul.mubr.f32.gmra.mrb[0].mxu0 %v554
      %v701 = vpop.f32.mrb[0].mxu0
      %v702 = vadd.f32 %v583, %v701
      %v703 = vpop.f32.mrb[0].mxu0
      %704 = vmatprep.mubr.f32.mxu0 0.0
      %705 = vmatmul.mubr.f32.gmra.mrb[0].mxu0 %v555
      %v706 = vpop.f32.mrb[0].mxu0
      %v707 = vadd.f32 %v583, %v706
      %v708 = vpop.f32.mrb[0].mxu0
      %709 = vmatprep.mubr.f32.mxu0 0.0
      %710 = vmatmul.mubr.f32.gmra.mrb[0].mxu0 %v556
      %v711 = vpop.f32.mrb[0].mxu0
      %v712 = vadd.f32 %v583, %v711
      %v713 = vpop.f32.mrb[0].mxu0
      %714 = vmatprep.mubr.f32.mxu0 0.0
      %715 = vmatmul.mubr.f32.gmra.mrb[0].mxu0 %v557
      %v716 = vpop.f32.mrb[0].mxu0
      %v717 = vadd.f32 %v583, %v716
      %v718 = vpop.f32.mrb[0].mxu0
      %719 = vmatprep.mubr.f32.mxu0 0.0
      %720 = vmatmul.mubr.f32.gmra.mrb[0].mxu0 %v558
      %v721 = vpop.f32.mrb[0].mxu0
      %v722 = vadd.f32 %v583, %v721
      %v723 = vpop.f32.mrb[0].mxu0
      %724 = vmatprep.mubr.f32.mxu0 0.0
      %725 = vmatmul.mubr.f32.gmra.mrb[0].mxu0 %v559
      %v726 = vpop.f32.mrb[0].mxu0
      %v727 = vadd.f32 %v583, %v726
      %v728 = vpop.f32.mrb[0].mxu0
      %729 = vdwg.mxu0
      %v730 = vtanh.pop %v652
      %v731 = vtanh.pop %v657
      %v732 = vtanh.pop %v662
      %v733 = vtanh.pop %v667
      %v734 = vtanh.pop %v672
      %v735 = vtanh.pop %v677
      %v736 = vtanh.pop %v682
      %v737 = vtanh.pop %v687
      %v738 = vtanh.pop %v692
      %v739 = vtanh.pop %v697
      %v740 = vtanh.pop %v702
      %v741 = vtanh.pop %v707
      %v742 = vtanh.pop %v712
      %v743 = vtanh.pop %v717
      %v744 = vtanh.pop %v722
      %v745 = vtanh.pop %v727
      %s746 = scalar_lea.vmem %s1, 384
      %v747 = vld [vmem:[%s746] sm:$0xff]
      %v748 = vld [vmem:[%s746 + $0x8] sm:$0xff]
      %v749 = vld [vmem:[%s746 + $0x10] sm:$0xff]
      %v750 = vld [vmem:[%s746 + $0x18] sm:$0xff]
      %v751 = vld [vmem:[%s746 + $0x20] sm:$0xff]
      %v752 = vld [vmem:[%s746 + $0x28] sm:$0xff]
      %v753 = vld [vmem:[%s746 + $0x30] sm:$0xff]
      %v754 = vld [vmem:[%s746 + $0x38] sm:$0xff]
      %v755 = vld [vmem:[%s746 + $0x40] sm:$0xff]
      %v756 = vld [vmem:[%s746 + $0x48] sm:$0xff]
      %v757 = vld [vmem:[%s746 + $0x50] sm:$0xff]
      %v758 = vld [vmem:[%s746 + $0x58] sm:$0xff]
      %v759 = vld [vmem:[%s746 + $0x60] sm:$0xff]
      %v760 = vld [vmem:[%s746 + $0x68] sm:$0xff]
      %v761 = vld [vmem:[%s746 + $0x70] sm:$0xff]
      %v762 = vld [vmem:[%s746 + $0x78] sm:$0xff]
      %s763 = scalar_lea.vmem %s2, 3
      %v764 = vld [vmem:[%s763] sm:$0x1]
      %v766 = vlaneseq
      %v767 = vshrl.u32 %v766, 7
      %v768 = vsub.s32 0, %v767
      %v769 = vrot.slane %v764, %v768
      %771 = vmatprep.subr.mxu0 0.0
      %772 = vmatpush1.msra.mxu0 %v747
      %773 = vmatprep.subr.mxu0 0.0
      %774 = vmatpush1.msra.mxu0 %v748
      %775 = vmatprep.subr.mxu0 0.0
      %776 = vmatpush1.msra.mxu0 %v749
      %777 = vmatprep.subr.mxu0 0.0
      %778 = vmatpush1.msra.mxu0 %v750
      %779 = vmatprep.subr.mxu0 0.0
      %780 = vmatpush1.msra.mxu0 %v751
      %781 = vmatprep.subr.mxu0 0.0
      %782 = vmatpush1.msra.mxu0 %v752
      %783 = vmatprep.subr.mxu0 0.0
      %784 = vmatpush1.msra.mxu0 %v753
      %785 = vmatprep.subr.mxu0 0.0
      %786 = vmatpush1.msra.mxu0 %v754
      %787 = vmatprep.subr.mxu0 0.0
      %788 = vmatpush1.msra.mxu0 %v755
      %789 = vmatprep.subr.mxu0 0.0
      %790 = vmatpush1.msra.mxu0 %v756
      %791 = vmatprep.subr.mxu0 0.0
      %792 = vmatpush1.msra.mxu0 %v757
      %793 = vmatprep.subr.mxu0 0.0
      %794 = vmatpush1.msra.mxu0 %v758
      %795 = vmatprep.subr.mxu0 0.0
      %796 = vmatpush1.msra.mxu0 %v759
      %797 = vmatprep.subr.mxu0 0.0
      %798 = vmatpush1.msra.mxu0 %v760
      %799 = vmatprep.subr.mxu0 0.0
      %800 = vmatpush1.msra.mxu0 %v761
      %801 = vmatprep.subr.mxu0 0.0
      %802 = vmatpush1.msra.mxu0 %v762
      %803 = vmatprep.subr.mxu0 0.0
      %804 = vmatpush1.msra.mxu0 0.0
      %805 = vmatprep.subr.mxu0 0.0
      %806 = vmatpush1.msra.mxu0 0.0
      %807 = vmatprep.subr.mxu0 0.0
      %808 = vmatpush1.msra.mxu0 0.0
      %809 = vmatprep.subr.mxu0 0.0
      %810 = vmatpush1.msra.mxu0 0.0
      %811 = vmatprep.subr.mxu0 0.0
      %812 = vmatpush1.msra.mxu0 0.0
      %813 = vmatprep.subr.mxu0 0.0
      %814 = vmatpush1.msra.mxu0 0.0
      %815 = vmatprep.subr.mxu0 0.0
      %816 = vmatpush1.msra.mxu0 0.0
      %817 = vmatprep.subr.mxu0 0.0
      %818 = vmatpush1.msra.mxu0 0.0
      %819 = vmatprep.subr.mxu0 0.0
      %820 = vmatpush1.msra.mxu0 0.0
      %821 = vmatprep.subr.mxu0 0.0
      %822 = vmatpush1.msra.mxu0 0.0
      %823 = vmatprep.subr.mxu0 0.0
      %824 = vmatpush1.msra.mxu0 0.0
      %825 = vmatprep.subr.mxu0 0.0
      %826 = vmatpush1.msra.mxu0 0.0
      %827 = vmatprep.subr.mxu0 0.0
      %828 = vmatpush1.msra.mxu0 0.0
      %829 = vmatprep.subr.mxu0 0.0
      %830 = vmatpush1.msra.mxu0 0.0
      %831 = vmatprep.subr.mxu0 0.0
      %832 = vmatpush1.msra.mxu0 0.0
      %833 = vmatprep.subr.mxu0 0.0
      %834 = vmatpush1.msra.mxu0 0.0
      %835 = vmatprep.mubr.f32.mxu0 0.0
      %836 = vmatmul.mubr.f32.gmra.mrb[0].mxu0 %v730
      %v837 = vpop.f32.mrb[0].mxu0
      %v838 = vadd.f32 %v769, %v837
      %v839 = vpop.f32.mrb[0].mxu0
      %840 = vmatprep.mubr.f32.mxu0 0.0
      %841 = vmatmul.mubr.f32.gmra.mrb[0].mxu0 %v731
      %v842 = vpop.f32.mrb[0].mxu0
      %v843 = vadd.f32 %v769, %v842
      %v844 = vpop.f32.mrb[0].mxu0
      %845 = vmatprep.mubr.f32.mxu0 0.0
      %846 = vmatmul.mubr.f32.gmra.mrb[0].mxu0 %v732
      %v847 = vpop.f32.mrb[0].mxu0
      %v848 = vadd.f32 %v769, %v847
      %v849 = vpop.f32.mrb[0].mxu0
      %850 = vmatprep.mubr.f32.mxu0 0.0
      %851 = vmatmul.mubr.f32.gmra.mrb[0].mxu0 %v733
      %v852 = vpop.f32.mrb[0].mxu0
      %v853 = vadd.f32 %v769, %v852
      %v854 = vpop.f32.mrb[0].mxu0
      %855 = vmatprep.mubr.f32.mxu0 0.0
      %856 = vmatmul.mubr.f32.gmra.mrb[0].mxu0 %v734
      %v857 = vpop.f32.mrb[0].mxu0
      %v858 = vadd.f32 %v769, %v857
      %v859 = vpop.f32.mrb[0].mxu0
      %860 = vmatprep.mubr.f32.mxu0 0.0
      %861 = vmatmul.mubr.f32.gmra.mrb[0].mxu0 %v735
      %v862 = vpop.f32.mrb[0].mxu0
      %v863 = vadd.f32 %v769, %v862
      %v864 = vpop.f32.mrb[0].mxu0
      %865 = vmatprep.mubr.f32.mxu0 0.0
      %866 = vmatmul.mubr.f32.gmra.mrb[0].mxu0 %v736
      %v867 = vpop.f32.mrb[0].mxu0
      %v868 = vadd.f32 %v769, %v867
      %v869 = vpop.f32.mrb[0].mxu0
      %870 = vmatprep.mubr.f32.mxu0 0.0
      %871 = vmatmul.mubr.f32.gmra.mrb[0].mxu0 %v737
      %v872 = vpop.f32.mrb[0].mxu0
      %v873 = vadd.f32 %v769, %v872
      %v874 = vpop.f32.mrb[0].mxu0
      %875 = vmatprep.mubr.f32.mxu0 0.0
      %876 = vmatmul.mubr.f32.gmra.mrb[0].mxu0 %v738
      %v877 = vpop.f32.mrb[0].mxu0
      %v878 = vadd.f32 %v769, %v877
      %v879 = vpop.f32.mrb[0].mxu0
      %880 = vmatprep.mubr.f32.mxu0 0.0
      %881 = vmatmul.mubr.f32.gmra.mrb[0].mxu0 %v739
      %v882 = vpop.f32.mrb[0].mxu0
      %v883 = vadd.f32 %v769, %v882
      %v884 = vpop.f32.mrb[0].mxu0
      %885 = vmatprep.mubr.f32.mxu0 0.0
      %886 = vmatmul.mubr.f32.gmra.mrb[0].mxu0 %v740
      %v887 = vpop.f32.mrb[0].mxu0
      %v888 = vadd.f32 %v769, %v887
      %v889 = vpop.f32.mrb[0].mxu0
      %890 = vmatprep.mubr.f32.mxu0 0.0
      %891 = vmatmul.mubr.f32.gmra.mrb[0].mxu0 %v741
      %v892 = vpop.f32.mrb[0].mxu0
      %v893 = vadd.f32 %v769, %v892
      %v894 = vpop.f32.mrb[0].mxu0
      %895 = vmatprep.mubr.f32.mxu0 0.0
      %896 = vmatmul.mubr.f32.gmra.mrb[0].mxu0 %v742
      %v897 = vpop.f32.mrb[0].mxu0
      %v898 = vadd.f32 %v769, %v897
      %v899 = vpop.f32.mrb[0].mxu0
      %900 = vmatprep.mubr.f32.mxu0 0.0
      %901 = vmatmul.mubr.f32.gmra.mrb[0].mxu0 %v743
      %v902 = vpop.f32.mrb[0].mxu0
      %v903 = vadd.f32 %v769, %v902
      %v904 = vpop.f32.mrb[0].mxu0
      %905 = vmatprep.mubr.f32.mxu0 0.0
      %906 = vmatmul.mubr.f32.gmra.mrb[0].mxu0 %v744
      %v907 = vpop.f32.mrb[0].mxu0
      %v908 = vadd.f32 %v769, %v907
      %v909 = vpop.f32.mrb[0].mxu0
      %910 = vmatprep.mubr.f32.mxu0 0.0
      %911 = vmatmul.mubr.f32.gmra.mrb[0].mxu0 %v745
      %v912 = vpop.f32.mrb[0].mxu0
      %v913 = vadd.f32 %v769, %v912
      %v914 = vpop.f32.mrb[0].mxu0
      %915 = vdwg.mxu0
      %v916 = vtanh.pop %v838
      %v917 = vtanh.pop %v843
      %v918 = vtanh.pop %v848
      %v919 = vtanh.pop %v853
      %v920 = vtanh.pop %v858
      %v921 = vtanh.pop %v863
      %v922 = vtanh.pop %v868
      %v923 = vtanh.pop %v873
      %v924 = vtanh.pop %v878
      %v925 = vtanh.pop %v883
      %v926 = vtanh.pop %v888
      %v927 = vtanh.pop %v893
      %v928 = vtanh.pop %v898
      %v929 = vtanh.pop %v903
      %v930 = vtanh.pop %v908
      %v931 = vtanh.pop %v913
      %s932 = scalar_lea.vmem %s1, 512
      %v933 = vld [vmem:[%s932] sm:$0xff]
      %v934 = vld [vmem:[%s932 + $0x8] sm:$0xff]
      %v935 = vld [vmem:[%s932 + $0x10] sm:$0xff]
      %v936 = vld [vmem:[%s932 + $0x18] sm:$0xff]
      %v937 = vld [vmem:[%s932 + $0x20] sm:$0xff]
      %v938 = vld [vmem:[%s932 + $0x28] sm:$0xff]
      %v939 = vld [vmem:[%s932 + $0x30] sm:$0xff]
      %v940 = vld [vmem:[%s932 + $0x38] sm:$0xff]
      %v941 = vld [vmem:[%s932 + $0x40] sm:$0xff]
      %v942 = vld [vmem:[%s932 + $0x48] sm:$0xff]
      %v943 = vld [vmem:[%s932 + $0x50] sm:$0xff]
      %v944 = vld [vmem:[%s932 + $0x58] sm:$0xff]
      %v945 = vld [vmem:[%s932 + $0x60] sm:$0xff]
      %v946 = vld [vmem:[%s932 + $0x68] sm:$0xff]
      %v947 = vld [vmem:[%s932 + $0x70] sm:$0xff]
      %v948 = vld [vmem:[%s932 + $0x78] sm:$0xff]
      %s949 = scalar_lea.vmem %s2, 4
      %v950 = vld [vmem:[%s949] sm:$0x1]
      %v952 = vlaneseq
      %v953 = vshrl.u32 %v952, 7
      %v954 = vsub.s32 0, %v953
      %v955 = vrot.slane %v950, %v954
      %957 = vmatprep.subr.mxu0 0.0
      %958 = vmatpush1.msra.mxu0 %v933
      %959 = vmatprep.subr.mxu0 0.0
      %960 = vmatpush1.msra.mxu0 %v934
      %961 = vmatprep.subr.mxu0 0.0
      %962 = vmatpush1.msra.mxu0 %v935
      %963 = vmatprep.subr.mxu0 0.0
      %964 = vmatpush1.msra.mxu0 %v936
      %965 = vmatprep.subr.mxu0 0.0
      %966 = vmatpush1.msra.mxu0 %v937
      %967 = vmatprep.subr.mxu0 0.0
      %968 = vmatpush1.msra.mxu0 %v938
      %969 = vmatprep.subr.mxu0 0.0
      %970 = vmatpush1.msra.mxu0 %v939
      %971 = vmatprep.subr.mxu0 0.0
      %972 = vmatpush1.msra.mxu0 %v940
      %973 = vmatprep.subr.mxu0 0.0
      %974 = vmatpush1.msra.mxu0 %v941
      %975 = vmatprep.subr.mxu0 0.0
      %976 = vmatpush1.msra.mxu0 %v942
      %977 = vmatprep.subr.mxu0 0.0
      %978 = vmatpush1.msra.mxu0 %v943
      %979 = vmatprep.subr.mxu0 0.0
      %980 = vmatpush1.msra.mxu0 %v944
      %981 = vmatprep.subr.mxu0 0.0
      %982 = vmatpush1.msra.mxu0 %v945
      %983 = vmatprep.subr.mxu0 0.0
      %984 = vmatpush1.msra.mxu0 %v946
      %985 = vmatprep.subr.mxu0 0.0
      %986 = vmatpush1.msra.mxu0 %v947
      %987 = vmatprep.subr.mxu0 0.0
      %988 = vmatpush1.msra.mxu0 %v948
      %989 = vmatprep.subr.mxu0 0.0
      %990 = vmatpush1.msra.mxu0 0.0
      %991 = vmatprep.subr.mxu0 0.0
      %992 = vmatpush1.msra.mxu0 0.0
      %993 = vmatprep.subr.mxu0 0.0
      %994 = vmatpush1.msra.mxu0 0.0
      %995 = vmatprep.subr.mxu0 0.0
      %996 = vmatpush1.msra.mxu0 0.0
      %997 = vmatprep.subr.mxu0 0.0
      %998 = vmatpush1.msra.mxu0 0.0
      %999 = vmatprep.subr.mxu0 0.0
      %1000 = vmatpush1.msra.mxu0 0.0
      %1001 = vmatprep.subr.mxu0 0.0
      %1002 = vmatpush1.msra.mxu0 0.0
      %1003 = vmatprep.subr.mxu0 0.0
      %1004 = vmatpush1.msra.mxu0 0.0
      %1005 = vmatprep.subr.mxu0 0.0
      %1006 = vmatpush1.msra.mxu0 0.0
      %1007 = vmatprep.subr.mxu0 0.0
      %1008 = vmatpush1.msra.mxu0 0.0
      %1009 = vmatprep.subr.mxu0 0.0
      %1010 = vmatpush1.msra.mxu0 0.0
      %1011 = vmatprep.subr.mxu0 0.0
      %1012 = vmatpush1.msra.mxu0 0.0
      %1013 = vmatprep.subr.mxu0 0.0
      %1014 = vmatpush1.msra.mxu0 0.0
      %1015 = vmatprep.subr.mxu0 0.0
      %1016 = vmatpush1.msra.mxu0 0.0
      %1017 = vmatprep.subr.mxu0 0.0
      %1018 = vmatpush1.msra.mxu0 0.0
      %1019 = vmatprep.subr.mxu0 0.0
      %1020 = vmatpush1.msra.mxu0 0.0
      %1021 = vmatprep.mubr.f32.mxu0 0.0
      %1022 = vmatmul.mubr.f32.gmra.mrb[0].mxu0 %v916
      %v1023 = vpop.f32.mrb[0].mxu0
      %v1024 = vadd.f32 %v955, %v1023
      %v1025 = vpop.f32.mrb[0].mxu0
      %1026 = vmatprep.mubr.f32.mxu0 0.0
      %1027 = vmatmul.mubr.f32.gmra.mrb[0].mxu0 %v917
      %v1028 = vpop.f32.mrb[0].mxu0
      %v1029 = vadd.f32 %v955, %v1028
      %v1030 = vpop.f32.mrb[0].mxu0
      %1031 = vmatprep.mubr.f32.mxu0 0.0
      %1032 = vmatmul.mubr.f32.gmra.mrb[0].mxu0 %v918
      %v1033 = vpop.f32.mrb[0].mxu0
      %v1034 = vadd.f32 %v955, %v1033
      %v1035 = vpop.f32.mrb[0].mxu0
      %1036 = vmatprep.mubr.f32.mxu0 0.0
      %1037 = vmatmul.mubr.f32.gmra.mrb[0].mxu0 %v919
      %v1038 = vpop.f32.mrb[0].mxu0
      %v1039 = vadd.f32 %v955, %v1038
      %v1040 = vpop.f32.mrb[0].mxu0
      %1041 = vmatprep.mubr.f32.mxu0 0.0
      %1042 = vmatmul.mubr.f32.gmra.mrb[0].mxu0 %v920
      %v1043 = vpop.f32.mrb[0].mxu0
      %v1044 = vadd.f32 %v955, %v1043
      %v1045 = vpop.f32.mrb[0].mxu0
      %1046 = vmatprep.mubr.f32.mxu0 0.0
      %1047 = vmatmul.mubr.f32.gmra.mrb[0].mxu0 %v921
      %v1048 = vpop.f32.mrb[0].mxu0
      %v1049 = vadd.f32 %v955, %v1048
      %v1050 = vpop.f32.mrb[0].mxu0
      %1051 = vmatprep.mubr.f32.mxu0 0.0
      %1052 = vmatmul.mubr.f32.gmra.mrb[0].mxu0 %v922
      %v1053 = vpop.f32.mrb[0].mxu0
      %v1054 = vadd.f32 %v955, %v1053
      %v1055 = vpop.f32.mrb[0].mxu0
      %1056 = vmatprep.mubr.f32.mxu0 0.0
      %1057 = vmatmul.mubr.f32.gmra.mrb[0].mxu0 %v923
      %v1058 = vpop.f32.mrb[0].mxu0
      %v1059 = vadd.f32 %v955, %v1058
      %v1060 = vpop.f32.mrb[0].mxu0
      %1061 = vmatprep.mubr.f32.mxu0 0.0
      %1062 = vmatmul.mubr.f32.gmra.mrb[0].mxu0 %v924
      %v1063 = vpop.f32.mrb[0].mxu0
      %v1064 = vadd.f32 %v955, %v1063
      %v1065 = vpop.f32.mrb[0].mxu0
      %1066 = vmatprep.mubr.f32.mxu0 0.0
      %1067 = vmatmul.mubr.f32.gmra.mrb[0].mxu0 %v925
      %v1068 = vpop.f32.mrb[0].mxu0
      %v1069 = vadd.f32 %v955, %v1068
      %v1070 = vpop.f32.mrb[0].mxu0
      %1071 = vmatprep.mubr.f32.mxu0 0.0
      %1072 = vmatmul.mubr.f32.gmra.mrb[0].mxu0 %v926
      %v1073 = vpop.f32.mrb[0].mxu0
      %v1074 = vadd.f32 %v955, %v1073
      %v1075 = vpop.f32.mrb[0].mxu0
      %1076 = vmatprep.mubr.f32.mxu0 0.0
      %1077 = vmatmul.mubr.f32.gmra.mrb[0].mxu0 %v927
      %v1078 = vpop.f32.mrb[0].mxu0
      %v1079 = vadd.f32 %v955, %v1078
      %v1080 = vpop.f32.mrb[0].mxu0
      %1081 = vmatprep.mubr.f32.mxu0 0.0
      %1082 = vmatmul.mubr.f32.gmra.mrb[0].mxu0 %v928
      %v1083 = vpop.f32.mrb[0].mxu0
      %v1084 = vadd.f32 %v955, %v1083
      %v1085 = vpop.f32.mrb[0].mxu0
      %1086 = vmatprep.mubr.f32.mxu0 0.0
      %1087 = vmatmul.mubr.f32.gmra.mrb[0].mxu0 %v929
      %v1088 = vpop.f32.mrb[0].mxu0
      %v1089 = vadd.f32 %v955, %v1088
      %v1090 = vpop.f32.mrb[0].mxu0
      %1091 = vmatprep.mubr.f32.mxu0 0.0
      %1092 = vmatmul.mubr.f32.gmra.mrb[0].mxu0 %v930
      %v1093 = vpop.f32.mrb[0].mxu0
      %v1094 = vadd.f32 %v955, %v1093
      %v1095 = vpop.f32.mrb[0].mxu0
      %1096 = vmatprep.mubr.f32.mxu0 0.0
      %1097 = vmatmul.mubr.f32.gmra.mrb[0].mxu0 %v931
      %v1098 = vpop.f32.mrb[0].mxu0
      %v1099 = vadd.f32 %v955, %v1098
      %v1100 = vpop.f32.mrb[0].mxu0
      %1101 = vdwg.mxu0
      %v1102 = vtanh.pop %v1024
      %v1103 = vtanh.pop %v1029
      %v1104 = vtanh.pop %v1034
      %v1105 = vtanh.pop %v1039
      %v1106 = vtanh.pop %v1044
      %v1107 = vtanh.pop %v1049
      %v1108 = vtanh.pop %v1054
      %v1109 = vtanh.pop %v1059
      %v1110 = vtanh.pop %v1064
      %v1111 = vtanh.pop %v1069
      %v1112 = vtanh.pop %v1074
      %v1113 = vtanh.pop %v1079
      %v1114 = vtanh.pop %v1084
      %v1115 = vtanh.pop %v1089
      %v1116 = vtanh.pop %v1094
      %v1117 = vtanh.pop %v1099
      %s1118 = scalar_lea.vmem %s1, 640
      %v1119 = vld [vmem:[%s1118] sm:$0xff]
      %v1120 = vld [vmem:[%s1118 + $0x8] sm:$0xff]
      %v1121 = vld [vmem:[%s1118 + $0x10] sm:$0xff]
      %v1122 = vld [vmem:[%s1118 + $0x18] sm:$0xff]
      %v1123 = vld [vmem:[%s1118 + $0x20] sm:$0xff]
      %v1124 = vld [vmem:[%s1118 + $0x28] sm:$0xff]
      %v1125 = vld [vmem:[%s1118 + $0x30] sm:$0xff]
      %v1126 = vld [vmem:[%s1118 + $0x38] sm:$0xff]
      %v1127 = vld [vmem:[%s1118 + $0x40] sm:$0xff]
      %v1128 = vld [vmem:[%s1118 + $0x48] sm:$0xff]
      %v1129 = vld [vmem:[%s1118 + $0x50] sm:$0xff]
      %v1130 = vld [vmem:[%s1118 + $0x58] sm:$0xff]
      %v1131 = vld [vmem:[%s1118 + $0x60] sm:$0xff]
      %v1132 = vld [vmem:[%s1118 + $0x68] sm:$0xff]
      %v1133 = vld [vmem:[%s1118 + $0x70] sm:$0xff]
      %v1134 = vld [vmem:[%s1118 + $0x78] sm:$0xff]
      %s1135 = scalar_lea.vmem %s2, 5
      %v1136 = vld [vmem:[%s1135] sm:$0x1]
      %v1138 = vlaneseq
      %v1139 = vshrl.u32 %v1138, 7
      %v1140 = vsub.s32 0, %v1139
      %v1141 = vrot.slane %v1136, %v1140
      %1143 = vmatprep.subr.mxu0 0.0
      %1144 = vmatpush1.msra.mxu0 %v1119
      %1145 = vmatprep.subr.mxu0 0.0
      %1146 = vmatpush1.msra.mxu0 %v1120
      %1147 = vmatprep.subr.mxu0 0.0
      %1148 = vmatpush1.msra.mxu0 %v1121
      %1149 = vmatprep.subr.mxu0 0.0
      %1150 = vmatpush1.msra.mxu0 %v1122
      %1151 = vmatprep.subr.mxu0 0.0
      %1152 = vmatpush1.msra.mxu0 %v1123
      %1153 = vmatprep.subr.mxu0 0.0
      %1154 = vmatpush1.msra.mxu0 %v1124
      %1155 = vmatprep.subr.mxu0 0.0
      %1156 = vmatpush1.msra.mxu0 %v1125
      %1157 = vmatprep.subr.mxu0 0.0
      %1158 = vmatpush1.msra.mxu0 %v1126
      %1159 = vmatprep.subr.mxu0 0.0
      %1160 = vmatpush1.msra.mxu0 %v1127
      %1161 = vmatprep.subr.mxu0 0.0
      %1162 = vmatpush1.msra.mxu0 %v1128
      %1163 = vmatprep.subr.mxu0 0.0
      %1164 = vmatpush1.msra.mxu0 %v1129
      %1165 = vmatprep.subr.mxu0 0.0
      %1166 = vmatpush1.msra.mxu0 %v1130
      %1167 = vmatprep.subr.mxu0 0.0
      %1168 = vmatpush1.msra.mxu0 %v1131
      %1169 = vmatprep.subr.mxu0 0.0
      %1170 = vmatpush1.msra.mxu0 %v1132
      %1171 = vmatprep.subr.mxu0 0.0
      %1172 = vmatpush1.msra.mxu0 %v1133
      %1173 = vmatprep.subr.mxu0 0.0
      %1174 = vmatpush1.msra.mxu0 %v1134
      %1175 = vmatprep.subr.mxu0 0.0
      %1176 = vmatpush1.msra.mxu0 0.0
      %1177 = vmatprep.subr.mxu0 0.0
      %1178 = vmatpush1.msra.mxu0 0.0
      %1179 = vmatprep.subr.mxu0 0.0
      %1180 = vmatpush1.msra.mxu0 0.0
      %1181 = vmatprep.subr.mxu0 0.0
      %1182 = vmatpush1.msra.mxu0 0.0
      %1183 = vmatprep.subr.mxu0 0.0
      %1184 = vmatpush1.msra.mxu0 0.0
      %1185 = vmatprep.subr.mxu0 0.0
      %1186 = vmatpush1.msra.mxu0 0.0
      %1187 = vmatprep.subr.mxu0 0.0
      %1188 = vmatpush1.msra.mxu0 0.0
      %1189 = vmatprep.subr.mxu0 0.0
      %1190 = vmatpush1.msra.mxu0 0.0
      %1191 = vmatprep.subr.mxu0 0.0
      %1192 = vmatpush1.msra.mxu0 0.0
      %1193 = vmatprep.subr.mxu0 0.0
      %1194 = vmatpush1.msra.mxu0 0.0
      %1195 = vmatprep.subr.mxu0 0.0
      %1196 = vmatpush1.msra.mxu0 0.0
      %1197 = vmatprep.subr.mxu0 0.0
      %1198 = vmatpush1.msra.mxu0 0.0
      %1199 = vmatprep.subr.mxu0 0.0
      %1200 = vmatpush1.msra.mxu0 0.0
      %1201 = vmatprep.subr.mxu0 0.0
      %1202 = vmatpush1.msra.mxu0 0.0
      %1203 = vmatprep.subr.mxu0 0.0
      %1204 = vmatpush1.msra.mxu0 0.0
      %1205 = vmatprep.subr.mxu0 0.0
      %1206 = vmatpush1.msra.mxu0 0.0
      %1207 = vmatprep.mubr.f32.mxu0 0.0
      %1208 = vmatmul.mubr.f32.gmra.mrb[0].mxu0 %v1102
      %v1209 = vpop.f32.mrb[0].mxu0
      %v1210 = vadd.f32 %v1141, %v1209
      %v1211 = vpop.f32.mrb[0].mxu0
      %1212 = vmatprep.mubr.f32.mxu0 0.0
      %1213 = vmatmul.mubr.f32.gmra.mrb[0].mxu0 %v1103
      %v1214 = vpop.f32.mrb[0].mxu0
      %v1215 = vadd.f32 %v1141, %v1214
      %v1216 = vpop.f32.mrb[0].mxu0
      %1217 = vmatprep.mubr.f32.mxu0 0.0
      %1218 = vmatmul.mubr.f32.gmra.mrb[0].mxu0 %v1104
      %v1219 = vpop.f32.mrb[0].mxu0
      %v1220 = vadd.f32 %v1141, %v1219
      %v1221 = vpop.f32.mrb[0].mxu0
      %1222 = vmatprep.mubr.f32.mxu0 0.0
      %1223 = vmatmul.mubr.f32.gmra.mrb[0].mxu0 %v1105
      %v1224 = vpop.f32.mrb[0].mxu0
      %v1225 = vadd.f32 %v1141, %v1224
      %v1226 = vpop.f32.mrb[0].mxu0
      %1227 = vmatprep.mubr.f32.mxu0 0.0
      %1228 = vmatmul.mubr.f32.gmra.mrb[0].mxu0 %v1106
      %v1229 = vpop.f32.mrb[0].mxu0
      %v1230 = vadd.f32 %v1141, %v1229
      %v1231 = vpop.f32.mrb[0].mxu0
      %1232 = vmatprep.mubr.f32.mxu0 0.0
      %1233 = vmatmul.mubr.f32.gmra.mrb[0].mxu0 %v1107
      %v1234 = vpop.f32.mrb[0].mxu0
      %v1235 = vadd.f32 %v1141, %v1234
      %v1236 = vpop.f32.mrb[0].mxu0
      %1237 = vmatprep.mubr.f32.mxu0 0.0
      %1238 = vmatmul.mubr.f32.gmra.mrb[0].mxu0 %v1108
      %v1239 = vpop.f32.mrb[0].mxu0
      %v1240 = vadd.f32 %v1141, %v1239
      %v1241 = vpop.f32.mrb[0].mxu0
      %1242 = vmatprep.mubr.f32.mxu0 0.0
      %1243 = vmatmul.mubr.f32.gmra.mrb[0].mxu0 %v1109
      %v1244 = vpop.f32.mrb[0].mxu0
      %v1245 = vadd.f32 %v1141, %v1244
      %v1246 = vpop.f32.mrb[0].mxu0
      %1247 = vmatprep.mubr.f32.mxu0 0.0
      %1248 = vmatmul.mubr.f32.gmra.mrb[0].mxu0 %v1110
      %v1249 = vpop.f32.mrb[0].mxu0
      %v1250 = vadd.f32 %v1141, %v1249
      %v1251 = vpop.f32.mrb[0].mxu0
      %1252 = vmatprep.mubr.f32.mxu0 0.0
      %1253 = vmatmul.mubr.f32.gmra.mrb[0].mxu0 %v1111
      %v1254 = vpop.f32.mrb[0].mxu0
      %v1255 = vadd.f32 %v1141, %v1254
      %v1256 = vpop.f32.mrb[0].mxu0
      %1257 = vmatprep.mubr.f32.mxu0 0.0
      %1258 = vmatmul.mubr.f32.gmra.mrb[0].mxu0 %v1112
      %v1259 = vpop.f32.mrb[0].mxu0
      %v1260 = vadd.f32 %v1141, %v1259
      %v1261 = vpop.f32.mrb[0].mxu0
      %1262 = vmatprep.mubr.f32.mxu0 0.0
      %1263 = vmatmul.mubr.f32.gmra.mrb[0].mxu0 %v1113
      %v1264 = vpop.f32.mrb[0].mxu0
      %v1265 = vadd.f32 %v1141, %v1264
      %v1266 = vpop.f32.mrb[0].mxu0
      %1267 = vmatprep.mubr.f32.mxu0 0.0
      %1268 = vmatmul.mubr.f32.gmra.mrb[0].mxu0 %v1114
      %v1269 = vpop.f32.mrb[0].mxu0
      %v1270 = vadd.f32 %v1141, %v1269
      %v1271 = vpop.f32.mrb[0].mxu0
      %1272 = vmatprep.mubr.f32.mxu0 0.0
      %1273 = vmatmul.mubr.f32.gmra.mrb[0].mxu0 %v1115
      %v1274 = vpop.f32.mrb[0].mxu0
      %v1275 = vadd.f32 %v1141, %v1274
      %v1276 = vpop.f32.mrb[0].mxu0
      %1277 = vmatprep.mubr.f32.mxu0 0.0
      %1278 = vmatmul.mubr.f32.gmra.mrb[0].mxu0 %v1116
      %v1279 = vpop.f32.mrb[0].mxu0
      %v1280 = vadd.f32 %v1141, %v1279
      %v1281 = vpop.f32.mrb[0].mxu0
      %1282 = vmatprep.mubr.f32.mxu0 0.0
      %1283 = vmatmul.mubr.f32.gmra.mrb[0].mxu0 %v1117
      %v1284 = vpop.f32.mrb[0].mxu0
      %v1285 = vadd.f32 %v1141, %v1284
      %v1286 = vpop.f32.mrb[0].mxu0
      %1287 = vdwg.mxu0
      %v1288 = vtanh.pop %v1210
      %v1289 = vtanh.pop %v1215
      %v1290 = vtanh.pop %v1220
      %v1291 = vtanh.pop %v1225
      %v1292 = vtanh.pop %v1230
      %v1293 = vtanh.pop %v1235
      %v1294 = vtanh.pop %v1240
      %v1295 = vtanh.pop %v1245
      %v1296 = vtanh.pop %v1250
      %v1297 = vtanh.pop %v1255
      %v1298 = vtanh.pop %v1260
      %v1299 = vtanh.pop %v1265
      %v1300 = vtanh.pop %v1270
      %v1301 = vtanh.pop %v1275
      %v1302 = vtanh.pop %v1280
      %v1303 = vtanh.pop %v1285
      %s1304 = scalar_lea.vmem %s1, 768
      %v1305 = vld [vmem:[%s1304] sm:$0xff]
      %v1306 = vld [vmem:[%s1304 + $0x8] sm:$0xff]
      %v1307 = vld [vmem:[%s1304 + $0x10] sm:$0xff]
      %v1308 = vld [vmem:[%s1304 + $0x18] sm:$0xff]
      %v1309 = vld [vmem:[%s1304 + $0x20] sm:$0xff]
      %v1310 = vld [vmem:[%s1304 + $0x28] sm:$0xff]
      %v1311 = vld [vmem:[%s1304 + $0x30] sm:$0xff]
      %v1312 = vld [vmem:[%s1304 + $0x38] sm:$0xff]
      %v1313 = vld [vmem:[%s1304 + $0x40] sm:$0xff]
      %v1314 = vld [vmem:[%s1304 + $0x48] sm:$0xff]
      %v1315 = vld [vmem:[%s1304 + $0x50] sm:$0xff]
      %v1316 = vld [vmem:[%s1304 + $0x58] sm:$0xff]
      %v1317 = vld [vmem:[%s1304 + $0x60] sm:$0xff]
      %v1318 = vld [vmem:[%s1304 + $0x68] sm:$0xff]
      %v1319 = vld [vmem:[%s1304 + $0x70] sm:$0xff]
      %v1320 = vld [vmem:[%s1304 + $0x78] sm:$0xff]
      %s1321 = scalar_lea.vmem %s2, 6
      %v1322 = vld [vmem:[%s1321] sm:$0x1]
      %v1324 = vlaneseq
      %v1325 = vshrl.u32 %v1324, 7
      %v1326 = vsub.s32 0, %v1325
      %v1327 = vrot.slane %v1322, %v1326
      %1329 = vmatprep.subr.mxu0 0.0
      %1330 = vmatpush1.msra.mxu0 %v1305
      %1331 = vmatprep.subr.mxu0 0.0
      %1332 = vmatpush1.msra.mxu0 %v1306
      %1333 = vmatprep.subr.mxu0 0.0
      %1334 = vmatpush1.msra.mxu0 %v1307
      %1335 = vmatprep.subr.mxu0 0.0
      %1336 = vmatpush1.msra.mxu0 %v1308
      %1337 = vmatprep.subr.mxu0 0.0
      %1338 = vmatpush1.msra.mxu0 %v1309
      %1339 = vmatprep.subr.mxu0 0.0
      %1340 = vmatpush1.msra.mxu0 %v1310
      %1341 = vmatprep.subr.mxu0 0.0
      %1342 = vmatpush1.msra.mxu0 %v1311
      %1343 = vmatprep.subr.mxu0 0.0
      %1344 = vmatpush1.msra.mxu0 %v1312
      %1345 = vmatprep.subr.mxu0 0.0
      %1346 = vmatpush1.msra.mxu0 %v1313
      %1347 = vmatprep.subr.mxu0 0.0
      %1348 = vmatpush1.msra.mxu0 %v1314
      %1349 = vmatprep.subr.mxu0 0.0
      %1350 = vmatpush1.msra.mxu0 %v1315
      %1351 = vmatprep.subr.mxu0 0.0
      %1352 = vmatpush1.msra.mxu0 %v1316
      %1353 = vmatprep.subr.mxu0 0.0
      %1354 = vmatpush1.msra.mxu0 %v1317
      %1355 = vmatprep.subr.mxu0 0.0
      %1356 = vmatpush1.msra.mxu0 %v1318
      %1357 = vmatprep.subr.mxu0 0.0
      %1358 = vmatpush1.msra.mxu0 %v1319
      %1359 = vmatprep.subr.mxu0 0.0
      %1360 = vmatpush1.msra.mxu0 %v1320
      %1361 = vmatprep.subr.mxu0 0.0
      %1362 = vmatpush1.msra.mxu0 0.0
      %1363 = vmatprep.subr.mxu0 0.0
      %1364 = vmatpush1.msra.mxu0 0.0
      %1365 = vmatprep.subr.mxu0 0.0
      %1366 = vmatpush1.msra.mxu0 0.0
      %1367 = vmatprep.subr.mxu0 0.0
      %1368 = vmatpush1.msra.mxu0 0.0
      %1369 = vmatprep.subr.mxu0 0.0
      %1370 = vmatpush1.msra.mxu0 0.0
      %1371 = vmatprep.subr.mxu0 0.0
      %1372 = vmatpush1.msra.mxu0 0.0
      %1373 = vmatprep.subr.mxu0 0.0
      %1374 = vmatpush1.msra.mxu0 0.0
      %1375 = vmatprep.subr.mxu0 0.0
      %1376 = vmatpush1.msra.mxu0 0.0
      %1377 = vmatprep.subr.mxu0 0.0
      %1378 = vmatpush1.msra.mxu0 0.0
      %1379 = vmatprep.subr.mxu0 0.0
      %1380 = vmatpush1.msra.mxu0 0.0
      %1381 = vmatprep.subr.mxu0 0.0
      %1382 = vmatpush1.msra.mxu0 0.0
      %1383 = vmatprep.subr.mxu0 0.0
      %1384 = vmatpush1.msra.mxu0 0.0
      %1385 = vmatprep.subr.mxu0 0.0
      %1386 = vmatpush1.msra.mxu0 0.0
      %1387 = vmatprep.subr.mxu0 0.0
      %1388 = vmatpush1.msra.mxu0 0.0
      %1389 = vmatprep.subr.mxu0 0.0
      %1390 = vmatpush1.msra.mxu0 0.0
      %1391 = vmatprep.subr.mxu0 0.0
      %1392 = vmatpush1.msra.mxu0 0.0
      %1393 = vmatprep.mubr.f32.mxu0 0.0
      %1394 = vmatmul.mubr.f32.gmra.mrb[0].mxu0 %v1288
      %v1395 = vpop.f32.mrb[0].mxu0
      %v1396 = vadd.f32 %v1327, %v1395
      %v1397 = vpop.f32.mrb[0].mxu0
      %1398 = vmatprep.mubr.f32.mxu0 0.0
      %1399 = vmatmul.mubr.f32.gmra.mrb[0].mxu0 %v1289
      %v1400 = vpop.f32.mrb[0].mxu0
      %v1401 = vadd.f32 %v1327, %v1400
      %v1402 = vpop.f32.mrb[0].mxu0
      %1403 = vmatprep.mubr.f32.mxu0 0.0
      %1404 = vmatmul.mubr.f32.gmra.mrb[0].mxu0 %v1290
      %v1405 = vpop.f32.mrb[0].mxu0
      %v1406 = vadd.f32 %v1327, %v1405
      %v1407 = vpop.f32.mrb[0].mxu0
      %1408 = vmatprep.mubr.f32.mxu0 0.0
      %1409 = vmatmul.mubr.f32.gmra.mrb[0].mxu0 %v1291
      %v1410 = vpop.f32.mrb[0].mxu0
      %v1411 = vadd.f32 %v1327, %v1410
      %v1412 = vpop.f32.mrb[0].mxu0
      %1413 = vmatprep.mubr.f32.mxu0 0.0
      %1414 = vmatmul.mubr.f32.gmra.mrb[0].mxu0 %v1292
      %v1415 = vpop.f32.mrb[0].mxu0
      %v1416 = vadd.f32 %v1327, %v1415
      %v1417 = vpop.f32.mrb[0].mxu0
      %1418 = vmatprep.mubr.f32.mxu0 0.0
      %1419 = vmatmul.mubr.f32.gmra.mrb[0].mxu0 %v1293
      %v1420 = vpop.f32.mrb[0].mxu0
      %v1421 = vadd.f32 %v1327, %v1420
      %v1422 = vpop.f32.mrb[0].mxu0
      %1423 = vmatprep.mubr.f32.mxu0 0.0
      %1424 = vmatmul.mubr.f32.gmra.mrb[0].mxu0 %v1294
      %v1425 = vpop.f32.mrb[0].mxu0
      %v1426 = vadd.f32 %v1327, %v1425
      %v1427 = vpop.f32.mrb[0].mxu0
      %1428 = vmatprep.mubr.f32.mxu0 0.0
      %1429 = vmatmul.mubr.f32.gmra.mrb[0].mxu0 %v1295
      %v1430 = vpop.f32.mrb[0].mxu0
      %v1431 = vadd.f32 %v1327, %v1430
      %v1432 = vpop.f32.mrb[0].mxu0
      %1433 = vmatprep.mubr.f32.mxu0 0.0
      %1434 = vmatmul.mubr.f32.gmra.mrb[0].mxu0 %v1296
      %v1435 = vpop.f32.mrb[0].mxu0
      %v1436 = vadd.f32 %v1327, %v1435
      %v1437 = vpop.f32.mrb[0].mxu0
      %1438 = vmatprep.mubr.f32.mxu0 0.0
      %1439 = vmatmul.mubr.f32.gmra.mrb[0].mxu0 %v1297
      %v1440 = vpop.f32.mrb[0].mxu0
      %v1441 = vadd.f32 %v1327, %v1440
      %v1442 = vpop.f32.mrb[0].mxu0
      %1443 = vmatprep.mubr.f32.mxu0 0.0
      %1444 = vmatmul.mubr.f32.gmra.mrb[0].mxu0 %v1298
      %v1445 = vpop.f32.mrb[0].mxu0
      %v1446 = vadd.f32 %v1327, %v1445
      %v1447 = vpop.f32.mrb[0].mxu0
      %1448 = vmatprep.mubr.f32.mxu0 0.0
      %1449 = vmatmul.mubr.f32.gmra.mrb[0].mxu0 %v1299
      %v1450 = vpop.f32.mrb[0].mxu0
      %v1451 = vadd.f32 %v1327, %v1450
      %v1452 = vpop.f32.mrb[0].mxu0
      %1453 = vmatprep.mubr.f32.mxu0 0.0
      %1454 = vmatmul.mubr.f32.gmra.mrb[0].mxu0 %v1300
      %v1455 = vpop.f32.mrb[0].mxu0
      %v1456 = vadd.f32 %v1327, %v1455
      %v1457 = vpop.f32.mrb[0].mxu0
      %1458 = vmatprep.mubr.f32.mxu0 0.0
      %1459 = vmatmul.mubr.f32.gmra.mrb[0].mxu0 %v1301
      %v1460 = vpop.f32.mrb[0].mxu0
      %v1461 = vadd.f32 %v1327, %v1460
      %v1462 = vpop.f32.mrb[0].mxu0
      %1463 = vmatprep.mubr.f32.mxu0 0.0
      %1464 = vmatmul.mubr.f32.gmra.mrb[0].mxu0 %v1302
      %v1465 = vpop.f32.mrb[0].mxu0
      %v1466 = vadd.f32 %v1327, %v1465
      %v1467 = vpop.f32.mrb[0].mxu0
      %1468 = vmatprep.mubr.f32.mxu0 0.0
      %1469 = vmatmul.mubr.f32.gmra.mrb[0].mxu0 %v1303
      %v1470 = vpop.f32.mrb[0].mxu0
      %v1471 = vadd.f32 %v1327, %v1470
      %v1472 = vpop.f32.mrb[0].mxu0
      %1473 = vdwg.mxu0
      %1474 = vst [vmem:[%s172] sm:$0xff] %v1396
      %1475 = vst [vmem:[%s172 + $0x8] sm:$0xff] %v1401
      %1476 = vst [vmem:[%s172 + $0x10] sm:$0xff] %v1406
      %1477 = vst [vmem:[%s172 + $0x18] sm:$0xff] %v1411
      %1478 = vst [vmem:[%s172 + $0x20] sm:$0xff] %v1416
      %1479 = vst [vmem:[%s172 + $0x28] sm:$0xff] %v1421
      %1480 = vst [vmem:[%s172 + $0x30] sm:$0xff] %v1426
      %1481 = vst [vmem:[%s172 + $0x38] sm:$0xff] %v1431
      %1482 = vst [vmem:[%s172 + $0x40] sm:$0xff] %v1436
      %1483 = vst [vmem:[%s172 + $0x48] sm:$0xff] %v1441
      %1484 = vst [vmem:[%s172 + $0x50] sm:$0xff] %v1446
      %1485 = vst [vmem:[%s172 + $0x58] sm:$0xff] %v1451
      %1486 = vst [vmem:[%s172 + $0x60] sm:$0xff] %v1456
      %1487 = vst [vmem:[%s172 + $0x68] sm:$0xff] %v1461
      %1488 = vst [vmem:[%s172 + $0x70] sm:$0xff] %v1466
      %1489 = vst [vmem:[%s172 + $0x78] sm:$0xff] %v1471
      %s1490 = smul.u32 16, %s14
      %p1491 = scmp.lt.s32.totalorder %s1490, 31
      %s1492 = scalar_select %p1491, %s1490, 31
      %s1493 = smul.addr %s1492, 8
      %s1494 = scalar_lea.vmem %s3, %s1493
      // Predicated region
      $region33: #{lift_net_forward.1} parent=31 // pred_check
        %p1495 = pneg %p100
      $region34: #{lift_net_forward.1} parent=31 // pred_check_branch
        %1497 = sbr.rel (%p1495) target = $region36
      $region35: #{lift_net_forward.1} parent=31 // pred_region
        %s1498 = smul.u32 16, %s14
      $region36: #{lift_net_forward.1} parent=31 // pred_fallthru
        _
    $region32: #{lift_net_forward.1} parent=5 // pred_fallthru
      _
    %p1499 = scmp.le.s32.totalorder 2, %s9
    // Predicated region
    $region37: #{lift_net_forward.1} parent=5 // pred_check
      %p1500 = pneg %p1499
    $region38: #{lift_net_forward.1} parent=5 // pred_check_branch
      %1502 = sbr.rel (%p1500) target = $region40
    $region39: #{lift_net_forward.1} parent=5 // pred_region
      %s1503 = ssub.s32 %s9, 2
      // Predicated region
      $region41: #{lift_net_forward.1} parent=39 // pred_check
        %p1504 = pneg %p106
      $region42: #{lift_net_forward.1} parent=39 // pred_check_branch
        %1506 = sbr.rel (%p1504) target = $region44
      $region43: #{lift_net_forward.1} parent=39 // pred_region
        %s1507 = smul.u32 16, %s15
        %p1508 = scmp.lt.s32.totalorder %s1507, 31
        %s1509 = scalar_select %p1508, %s1507, 31
        %s1510 = smul.addr %s1509, 8
        %s1511 = scalar_lea.vmem %s3, %s1510
      $region44: #{lift_net_forward.1} parent=39 // pred_fallthru
        _
    $region40: #{lift_net_forward.1} parent=5 // pred_fallthru
      _
  $region6: #{lift_net_forward.1} parent=0 // loop_footer
    %s13 = sadd.s32 1, %s9
  $region7: #{lift_net_forward.1} parent=0 // loop_footer_branch
    %8 = sbr.rel target = $region3
  $region8: #{lift_net_forward.1} parent=0 // loop_exit
    _

</llo_original>
